<compile_context>
chip_gen: v7x
topology: tpu7x:2x2x1
jax: 0.10.0
libtpu: 0.0.40
codegen_flags: <defaults>
</compile_context>

<pallas_src>
import jax
import jax.numpy as jnp
from jax.experimental import pallas as pl
from jax.experimental.pallas import tpu as pltpu


# ----------------------------------------------------------------------------
# Shared in-kernel LSTM stack step
# ----------------------------------------------------------------------------
def _lstm_stack_step(x, h_ref, c_ref, wx_refs, wh_refs, b_refs, hidden_dim):
    """Run every LSTM layer for one time step.

    x:        (B, in0) layer-0 input (one-hot token or embedded token)
    h_ref/c_ref: (L, B, H) state refs (VMEM scratch or resident output blocks),
                 updated in place.
    wx/wh/b:  per-layer weight refs, pre-transposed to (in, 4H)/(H, 4H)/(1, 4H).
    Gate order (PyTorch): i, f, g, o.  Returns top layer hidden (B, H).
    """
    H = hidden_dim
    for l in range(len(wx_refs)):
        h_prev = h_ref[l]
        c_prev = c_ref[l]
        # Two accumulating MXU dots into a single f32 gates tensor (B, 4H).
        gates = (jnp.dot(x, wx_refs[l][...], preferred_element_type=jnp.float32)
                 + jnp.dot(h_prev, wh_refs[l][...],
                           preferred_element_type=jnp.float32)
                 + b_refs[l][...])
        # One full-width sigmoid + one full-width tanh, then slice.
        sg = jax.nn.sigmoid(gates)
        th = jnp.tanh(gates)
        i_g = sg[:, 0 * H:1 * H]
        f_g = sg[:, 1 * H:2 * H]
        g_g = th[:, 2 * H:3 * H]
        o_g = sg[:, 3 * H:4 * H]
        c_new = f_g * c_prev + i_g * g_g
        h_new = o_g * jnp.tanh(c_new)
        h_ref[l] = h_new
        c_ref[l] = c_new
        x = h_new
    return x


# ----------------------------------------------------------------------------
# Encoder kernel: grid over source time steps, state in resident output blocks
# ----------------------------------------------------------------------------
def _make_encoder_kernel(num_layers, hidden_dim):
    def kernel(x_ref, *rest):
        L = num_layers
        wx = rest[0:L]
        wh = rest[L:2 * L]
        bb = rest[2 * L:3 * L]
        h_out = rest[3 * L]        # (L, B, H) resident output block
        c_out = rest[3 * L + 1]    # (L, B, H) resident output block

        @pl.when(pl.program_id(0) == 0)
        def _init():
            h_out[...] = jnp.zeros_like(h_out)
            c_out[...] = jnp.zeros_like(c_out)

        _lstm_stack_step(x_ref[0], h_out, c_out, wx, wh, bb, hidden_dim)

    return kernel


def _run_encoder(enc, src_emb):
    S, B, E = src_emb.shape
    L = len(enc["wx"])
    H = enc["wh"][0].shape[0]

    in_specs = ([pl.BlockSpec((1, B, E), lambda s: (s, 0, 0))]
                + [pl.BlockSpec(w.shape, lambda s: (0, 0)) for w in enc["wx"]]
                + [pl.BlockSpec(w.shape, lambda s: (0, 0)) for w in enc["wh"]]
                + [pl.BlockSpec(b.shape, lambda s: (0, 0)) for b in enc["b"]])
    out_specs = (pl.BlockSpec((L, B, H), lambda s: (0, 0, 0)),
                 pl.BlockSpec((L, B, H), lambda s: (0, 0, 0)))

    h_enc, c_enc = pl.pallas_call(
        _make_encoder_kernel(L, H),
        out_shape=(jax.ShapeDtypeStruct((L, B, H), jnp.float32),
                   jax.ShapeDtypeStruct((L, B, H), jnp.float32)),
        grid_spec=pltpu.PrefetchScalarGridSpec(
            num_scalar_prefetch=0,
            grid=(S,),
            in_specs=in_specs,
            out_specs=out_specs),
        compiler_params=pltpu.CompilerParams(
            dimension_semantics=("arbitrary",)),
    )(src_emb, *enc["wx"], *enc["wh"], *enc["b"])
    return h_enc, c_enc


# ----------------------------------------------------------------------------
# Decoder kernel: grid over target time steps, whole decode loop in one call
# ----------------------------------------------------------------------------
def _make_decoder_kernel(num_layers, hidden_dim):
    def kernel(tf_ref, tgt_oh_ref, h0_ref, c0_ref, *rest):
        L = num_layers
        wx = rest[0:L]
        wh = rest[L:2 * L]
        bb = rest[2 * L:3 * L]
        fcw_ref = rest[3 * L]
        fcb_ref = rest[3 * L + 1]
        out_ref = rest[3 * L + 2]
        h_scr = rest[3 * L + 3]    # (L, B, H) VMEM scratch
        c_scr = rest[3 * L + 4]    # (L, B, H) VMEM scratch
        x_scr = rest[3 * L + 5]    # (B, V)    VMEM scratch: current token one-hot

        t = pl.program_id(0)

        @pl.when(t == 0)
        def _init():
            h_scr[...] = h0_ref[...]
            c_scr[...] = c0_ref[...]
            x_scr[...] = tgt_oh_ref[0]               # one_hot(target[0])
            out_ref[...] = jnp.zeros_like(out_ref)   # outputs[0] stays zero

        @pl.when(t > 0)
        def _step():
            # layer-0 input is the one-hot token; embedding folded into wx[0]
            top_h = _lstm_stack_step(x_scr[...], h_scr, c_scr, wx, wh, bb,
                                     hidden_dim)
            pred = (jnp.dot(top_h, fcw_ref[...],
                            preferred_element_type=jnp.float32)
                    + fcb_ref[...])                  # (B, V)
            out_ref[0] = pred.astype(out_ref.dtype)

            # next input: teacher forcing vs in-kernel greedy argmax (first max)
            vocab = pred.shape[-1]
            lane = jax.lax.broadcasted_iota(jnp.int32, pred.shape, 1).astype(
                jnp.float32)
            row_max = jnp.max(pred, axis=-1, keepdims=True)
            first_hit = jnp.min(
                jnp.where(pred == row_max, lane, jnp.float32(vocab)),
                axis=-1, keepdims=True)
            greedy_oh = (lane == first_hit).astype(jnp.float32)
            tf = (tf_ref[t] == 1).astype(jnp.float32)
            x_scr[...] = tf * tgt_oh_ref[0] + (1.0 - tf) * greedy_oh

    return kernel


def _run_decoder(dec, tgt_onehot, tf_flags, h_enc, c_enc):
    T, B, V = tgt_onehot.shape
    L, _, H = h_enc.shape

    in_specs = ([pl.BlockSpec((1, B, V), lambda t, tf: (t, 0, 0)),
                 pl.BlockSpec((L, B, H), lambda t, tf: (0, 0, 0)),
                 pl.BlockSpec((L, B, H), lambda t, tf: (0, 0, 0))]
                + [pl.BlockSpec(w.shape, lambda t, tf: (0, 0)) for w in dec["wx"]]
                + [pl.BlockSpec(w.shape, lambda t, tf: (0, 0)) for w in dec["wh"]]
                + [pl.BlockSpec(b.shape, lambda t, tf: (0, 0)) for b in dec["b"]]
                + [pl.BlockSpec(dec["fc_w"].shape, lambda t, tf: (0, 0)),
                   pl.BlockSpec(dec["fc_b"].shape, lambda t, tf: (0, 0))])

    outputs = pl.pallas_call(
        _make_decoder_kernel(L, H),
        out_shape=jax.ShapeDtypeStruct((T, B, V), jnp.float32),
        grid_spec=pltpu.PrefetchScalarGridSpec(
            num_scalar_prefetch=1,           # teacher-forcing flags -> SMEM
            grid=(T,),
            in_specs=in_specs,
            out_specs=pl.BlockSpec((1, B, V), lambda t, tf: (t, 0, 0)),
            scratch_shapes=[pltpu.VMEM((L, B, H), jnp.float32),
                            pltpu.VMEM((L, B, H), jnp.float32),
                            pltpu.VMEM((B, V), jnp.float32)]),
        compiler_params=pltpu.CompilerParams(
            dimension_semantics=("arbitrary",)),
    )(tf_flags, tgt_onehot, h_enc, c_enc,
      *dec["wx"], *dec["wh"], *dec["b"], dec["fc_w"], dec["fc_b"])
    return outputs


# ----------------------------------------------------------------------------
# Parameters + top-level forward
# ----------------------------------------------------------------------------
def init_params(key, input_dim, output_dim, enc_emb_dim, dec_emb_dim,
                hidden_dim, num_layers):
    H = hidden_dim

    def nxt():
        nonlocal key
        key, sub = jax.random.split(key)
        return sub

    def rnd(shape):
        return 0.1 * jax.random.normal(nxt(), shape, jnp.float32)

    # encoder: Embedding(input_dim, E) + LSTM(E, H, L)
    enc = {"embedding": rnd((input_dim, enc_emb_dim)), "wx": [], "wh": [], "b": []}
    for l in range(num_layers):
        in_dim = enc_emb_dim if l == 0 else H
        enc["wx"].append(jnp.transpose(rnd((4 * H, in_dim))))   # (in, 4H)
        enc["wh"].append(jnp.transpose(rnd((4 * H, H))))        # (H, 4H)
        enc["b"].append((rnd((4 * H,)) + rnd((4 * H,))).reshape(1, 4 * H))

    # decoder: Embedding(output_dim, E) + LSTM(E, H, L) + Linear(H, output_dim)
    dec_embedding = rnd((output_dim, dec_emb_dim))
    dec = {"wx": [], "wh": [], "b": []}
    for l in range(num_layers):
        in_dim = dec_emb_dim if l == 0 else H
        w_ih_t = jnp.transpose(rnd((4 * H, in_dim)))            # (in, 4H)
        if l == 0:
            # fold embedding lookup into layer-0 weight: onehot @ (emb @ W_ih0^T)
            w_ih_t = jnp.dot(dec_embedding, w_ih_t)             # (vocab, 4H)
        dec["wx"].append(w_ih_t)
        dec["wh"].append(jnp.transpose(rnd((4 * H, H))))
        dec["b"].append((rnd((4 * H,)) + rnd((4 * H,))).reshape(1, 4 * H))
    dec["fc_w"] = jnp.transpose(rnd((output_dim, H)))           # (H, vocab)
    dec["fc_b"] = rnd((output_dim,)).reshape(1, output_dim)

    return {"enc": enc, "dec": dec}


@jax.jit
def seq2seq_forward(params, src, target, tf_flags):
    """src: (S, B) int32; target: (T, B) int32; tf_flags: (T,) int32 in {0,1}.
    Returns outputs (T, B, output_dim) with outputs[0] == 0 (as in the torch loop)."""
    enc = params["enc"]
    dec = params["dec"]
    # encoder embedding: one gather for the whole source sequence
    src_emb = jnp.take(enc["embedding"], src, axis=0)           # (S, B, E)
    h_enc, c_enc = _run_encoder(enc, src_emb)
    vocab = dec["fc_b"].shape[-1]
    tgt_onehot = jax.nn.one_hot(target, vocab, dtype=jnp.float32)  # (T, B, V)
    return _run_decoder(dec, tgt_onehot, tf_flags, h_enc, c_enc)


# ----------------------------------------------------------------------------
if __name__ == "__main__":
    INPUT_DIM = 32     # source vocab
    OUTPUT_DIM = 32    # target vocab
    ENC_EMB = 16
    DEC_EMB = 16
    HIDDEN_DIM = 32
    NUM_LAYERS = 2
    BATCH = 8
    SRC_LEN = 6
    TGT_LEN = 7
    TEACHER_FORCING_RATIO = 0.5

    root = jax.random.PRNGKey(0)
    k_param, k_src, k_tgt, k_tf = jax.random.split(root, 4)

    params = init_params(k_param, INPUT_DIM, OUTPUT_DIM, ENC_EMB, DEC_EMB,
                         HIDDEN_DIM, NUM_LAYERS)

    src = jax.random.randint(k_src, (SRC_LEN, BATCH), 0, INPUT_DIM, dtype=jnp.int32)
    target = jax.random.randint(k_tgt, (TGT_LEN, BATCH), 0, OUTPUT_DIM,
                                dtype=jnp.int32)
    tf_flags = (jax.random.uniform(k_tf, (TGT_LEN,))
                < TEACHER_FORCING_RATIO).astype(jnp.int32)

    outputs = seq2seq_forward(params, src, target, tf_flags)
    jax.block_until_ready(outputs)

    assert outputs.shape == (TGT_LEN, BATCH, OUTPUT_DIM)
    assert bool(jnp.all(outputs[0] == 0.0))
    assert bool(jnp.all(jnp.isfinite(outputs)))

    print("KERNEL_OK")
</pallas_src>

<mosaic_0001>
module attributes {stable_mosaic.version = 11 : i64} {
  func.func @kernel(%arg0: i32, %arg1: memref<1x8x16xf32, #tpu.memory_space<vmem>>, %arg2: memref<16x128xf32, #tpu.memory_space<vmem>>, %arg3: memref<32x128xf32, #tpu.memory_space<vmem>>, %arg4: memref<32x128xf32, #tpu.memory_space<vmem>>, %arg5: memref<32x128xf32, #tpu.memory_space<vmem>>, %arg6: memref<1x128xf32, #tpu.memory_space<vmem>>, %arg7: memref<1x128xf32, #tpu.memory_space<vmem>>, %arg8: memref<2x8x32xf32, #tpu.memory_space<vmem>>, %arg9: memref<2x8x32xf32, #tpu.memory_space<vmem>>) attributes {dimension_semantics = [#tpu.dimension_semantics<arbitrary>], iteration_bounds = array<i64: 6>, scalar_prefetch = 0 : i64, scratch_operands = 0 : i64, tpu.core_type = #tpu.core_type<tc>, window_params = [{transform_indices = @transform_0, window_bounds = array<i64: 1, 8, 16>}, {pipeline_mode = #tpu.pipeline_mode<synchronous>, transform_indices = @transform_1, window_bounds = array<i64: 16, 128>}, {pipeline_mode = #tpu.pipeline_mode<synchronous>, transform_indices = @transform_2, window_bounds = array<i64: 32, 128>}, {pipeline_mode = #tpu.pipeline_mode<synchronous>, transform_indices = @transform_3, window_bounds = array<i64: 32, 128>}, {pipeline_mode = #tpu.pipeline_mode<synchronous>, transform_indices = @transform_4, window_bounds = array<i64: 32, 128>}, {pipeline_mode = #tpu.pipeline_mode<synchronous>, transform_indices = @transform_5, window_bounds = array<i64: 1, 128>}, {pipeline_mode = #tpu.pipeline_mode<synchronous>, transform_indices = @transform_6, window_bounds = array<i64: 1, 128>}, {pipeline_mode = #tpu.pipeline_mode<synchronous>, transform_indices = @transform_7, window_bounds = array<i64: 2, 8, 32>}, {pipeline_mode = #tpu.pipeline_mode<synchronous>, transform_indices = @transform_8, window_bounds = array<i64: 2, 8, 32>}]} {
    %c0_i32 = arith.constant 0 : i32
    %0 = arith.cmpi eq, %arg0, %c0_i32 : i32
    %1 = arith.extui %0 : i1 to i32
    %c0_i32_0 = arith.constant 0 : i32
    %2 = arith.cmpi ne, %1, %c0_i32_0 : i32
    scf.if %2 {
      %cst_43 = arith.constant 0.000000e+00 : f32
      %71 = vector.broadcast %cst_43 : f32 to vector<2x8x32xf32>
      %c0_44 = arith.constant 0 : index
      %c0_45 = arith.constant 0 : index
      %c0_46 = arith.constant 0 : index
      %72 = vector.load %arg8[%c0_44, %c0_45, %c0_46] : memref<2x8x32xf32, #tpu.memory_space<vmem>>, vector<2x8x32xf32>
      tpu.vector_store %arg8[%c0_44, %c0_45, %c0_46], %71 {strides = array<i32>} : memref<2x8x32xf32, #tpu.memory_space<vmem>>, vector<2x8x32xf32>,
      %cst_47 = arith.constant 0.000000e+00 : f32
      %73 = vector.broadcast %cst_47 : f32 to vector<2x8x32xf32>
      %c0_48 = arith.constant 0 : index
      %c0_49 = arith.constant 0 : index
      %c0_50 = arith.constant 0 : index
      %74 = vector.load %arg9[%c0_48, %c0_49, %c0_50] : memref<2x8x32xf32, #tpu.memory_space<vmem>>, vector<2x8x32xf32>
      tpu.vector_store %arg9[%c0_48, %c0_49, %c0_50], %73 {strides = array<i32>} : memref<2x8x32xf32, #tpu.memory_space<vmem>>, vector<2x8x32xf32>,
    } else {
    }
    %c0 = arith.constant 0 : index
    %c0_1 = arith.constant 0 : index
    %c0_2 = arith.constant 0 : index
    %3 = vector.load %arg1[%c0, %c0_1, %c0_2] : memref<1x8x16xf32, #tpu.memory_space<vmem>>, vector<1x8x16xf32>
    %4 = vector.shape_cast %3 : vector<1x8x16xf32> to vector<8x16xf32>
    %c0_3 = arith.constant 0 : index
    %c0_4 = arith.constant 0 : index
    %c0_5 = arith.constant 0 : index
    %5 = vector.load %arg8[%c0_3, %c0_4, %c0_5] : memref<2x8x32xf32, #tpu.memory_space<vmem>>, vector<1x8x32xf32>
    %6 = vector.shape_cast %5 : vector<1x8x32xf32> to vector<8x32xf32>
    %c0_6 = arith.constant 0 : index
    %c0_7 = arith.constant 0 : index
    %c0_8 = arith.constant 0 : index
    %7 = vector.load %arg9[%c0_6, %c0_7, %c0_8] : memref<2x8x32xf32, #tpu.memory_space<vmem>>, vector<1x8x32xf32>
    %8 = vector.shape_cast %7 : vector<1x8x32xf32> to vector<8x32xf32>
    %c0_9 = arith.constant 0 : index
    %c0_10 = arith.constant 0 : index
    %9 = vector.load %arg2[%c0_9, %c0_10] : memref<16x128xf32, #tpu.memory_space<vmem>>, vector<16x128xf32>
    %cst = arith.constant dense<0.000000e+00> : vector<8x128xf32>
    %10 = tpu.matmul %4, %9, %cst {dimension_numbers = #tpu.dot_dimension_numbers<[1], [0], [0], [1], [0, 0, 1, 1], [], []>} : vector<8x16xf32>, vector<16x128xf32>, vector<8x128xf32> -> vector<8x128xf32>
    %c0_11 = arith.constant 0 : index
    %c0_12 = arith.constant 0 : index
    %11 = vector.load %arg4[%c0_11, %c0_12] : memref<32x128xf32, #tpu.memory_space<vmem>>, vector<32x128xf32>
    %cst_13 = arith.constant dense<0.000000e+00> : vector<8x128xf32>
    %12 = tpu.matmul %6, %11, %cst_13 {dimension_numbers = #tpu.dot_dimension_numbers<[1], [0], [0], [1], [0, 0, 1, 1], [], []>} : vector<8x32xf32>, vector<32x128xf32>, vector<8x128xf32> -> vector<8x128xf32>
    %13 = arith.addf %10, %12 : vector<8x128xf32>
    %c0_14 = arith.constant 0 : index
    %c0_15 = arith.constant 0 : index
    %14 = vector.load %arg6[%c0_14, %c0_15] : memref<1x128xf32, #tpu.memory_space<vmem>>, vector<1x128xf32>
    %15 = vector.broadcast %14 : vector<1x128xf32> to vector<8x128xf32>
    %16 = arith.addf %13, %15 : vector<8x128xf32>
    %17 = arith.negf %16 : vector<8x128xf32>
    %18 = math.exp %17 : vector<8x128xf32>
    %cst_16 = arith.constant 1.000000e+00 : f32
    %19 = vector.broadcast %cst_16 : f32 to vector<8x128xf32>
    %20 = arith.addf %19, %18 : vector<8x128xf32>
    %21 = arith.divf %19, %20 : vector<8x128xf32>
    %22 = math.tanh %16 : vector<8x128xf32>
    %23 = vector.extract_strided_slice %21 {offsets = [0, 0], sizes = [8, 32], strides = [1, 1]} : vector<8x128xf32> to vector<8x32xf32>
    %24 = vector.extract_strided_slice %21 {offsets = [0, 32], sizes = [8, 32], strides = [1, 1]} : vector<8x128xf32> to vector<8x32xf32>
    %25 = vector.extract_strided_slice %22 {offsets = [0, 64], sizes = [8, 32], strides = [1, 1]} : vector<8x128xf32> to vector<8x32xf32>
    %26 = vector.extract_strided_slice %21 {offsets = [0, 96], sizes = [8, 32], strides = [1, 1]} : vector<8x128xf32> to vector<8x32xf32>
    %27 = arith.mulf %24, %8 : vector<8x32xf32>
    %28 = arith.mulf %23, %25 : vector<8x32xf32>
    %29 = arith.addf %27, %28 : vector<8x32xf32>
    %30 = math.tanh %29 : vector<8x32xf32>
    %31 = arith.mulf %26, %30 : vector<8x32xf32>
    %c0_17 = arith.constant 0 : index
    %c0_18 = arith.constant 0 : index
    %c0_19 = arith.constant 0 : index
    %32 = vector.load %arg8[%c0_17, %c0_18, %c0_19] : memref<2x8x32xf32, #tpu.memory_space<vmem>>, vector<1x8x32xf32>
    %33 = vector.shape_cast %32 : vector<1x8x32xf32> to vector<8x32xf32>
    %34 = vector.shape_cast %31 : vector<8x32xf32> to vector<1x8x32xf32>
    tpu.vector_store %arg8[%c0_17, %c0_18, %c0_19], %34 {strides = array<i32>} : memref<2x8x32xf32, #tpu.memory_space<vmem>>, vector<1x8x32xf32>,
    %c0_20 = arith.constant 0 : index
    %c0_21 = arith.constant 0 : index
    %c0_22 = arith.constant 0 : index
    %35 = vector.load %arg9[%c0_20, %c0_21, %c0_22] : memref<2x8x32xf32, #tpu.memory_space<vmem>>, vector<1x8x32xf32>
    %36 = vector.shape_cast %35 : vector<1x8x32xf32> to vector<8x32xf32>
    %37 = vector.shape_cast %29 : vector<8x32xf32> to vector<1x8x32xf32>
    tpu.vector_store %arg9[%c0_20, %c0_21, %c0_22], %37 {strides = array<i32>} : memref<2x8x32xf32, #tpu.memory_space<vmem>>, vector<1x8x32xf32>,
    %c1 = arith.constant 1 : index
    %c0_23 = arith.constant 0 : index
    %c0_24 = arith.constant 0 : index
    %38 = vector.load %arg8[%c1, %c0_23, %c0_24] : memref<2x8x32xf32, #tpu.memory_space<vmem>>, vector<1x8x32xf32>
    %39 = vector.shape_cast %38 : vector<1x8x32xf32> to vector<8x32xf32>
    %c1_25 = arith.constant 1 : index
    %c0_26 = arith.constant 0 : index
    %c0_27 = arith.constant 0 : index
    %40 = vector.load %arg9[%c1_25, %c0_26, %c0_27] : memref<2x8x32xf32, #tpu.memory_space<vmem>>, vector<1x8x32xf32>
    %41 = vector.shape_cast %40 : vector<1x8x32xf32> to vector<8x32xf32>
    %c0_28 = arith.constant 0 : index
    %c0_29 = arith.constant 0 : index
    %42 = vector.load %arg3[%c0_28, %c0_29] : memref<32x128xf32, #tpu.memory_space<vmem>>, vector<32x128xf32>
    %cst_30 = arith.constant dense<0.000000e+00> : vector<8x128xf32>
    %43 = tpu.matmul %31, %42, %cst_30 {dimension_numbers = #tpu.dot_dimension_numbers<[1], [0], [0], [1], [0, 0, 1, 1], [], []>} : vector<8x32xf32>, vector<32x128xf32>, vector<8x128xf32> -> vector<8x128xf32>
    %c0_31 = arith.constant 0 : index
    %c0_32 = arith.constant 0 : index
    %44 = vector.load %arg5[%c0_31, %c0_32] : memref<32x128xf32, #tpu.memory_space<vmem>>, vector<32x128xf32>
    %cst_33 = arith.constant dense<0.000000e+00> : vector<8x128xf32>
    %45 = tpu.matmul %39, %44, %cst_33 {dimension_numbers = #tpu.dot_dimension_numbers<[1], [0], [0], [1], [0, 0, 1, 1], [], []>} : vector<8x32xf32>, vector<32x128xf32>, vector<8x128xf32> -> vector<8x128xf32>
    %46 = arith.addf %43, %45 : vector<8x128xf32>
    %c0_34 = arith.constant 0 : index
    %c0_35 = arith.constant 0 : index
    %47 = vector.load %arg7[%c0_34, %c0_35] : memref<1x128xf32, #tpu.memory_space<vmem>>, vector<1x128xf32>
    %48 = vector.broadcast %47 : vector<1x128xf32> to vector<8x128xf32>
    %49 = arith.addf %46, %48 : vector<8x128xf32>
    %50 = arith.negf %49 : vector<8x128xf32>
    %51 = math.exp %50 : vector<8x128xf32>
    %cst_36 = arith.constant 1.000000e+00 : f32
    %52 = vector.broadcast %cst_36 : f32 to vector<8x128xf32>
    %53 = arith.addf %52, %51 : vector<8x128xf32>
    %54 = arith.divf %52, %53 : vector<8x128xf32>
    %55 = math.tanh %49 : vector<8x128xf32>
    %56 = vector.extract_strided_slice %54 {offsets = [0, 0], sizes = [8, 32], strides = [1, 1]} : vector<8x128xf32> to vector<8x32xf32>
    %57 = vector.extract_strided_slice %54 {offsets = [0, 32], sizes = [8, 32], strides = [1, 1]} : vector<8x128xf32> to vector<8x32xf32>
    %58 = vector.extract_strided_slice %55 {offsets = [0, 64], sizes = [8, 32], strides = [1, 1]} : vector<8x128xf32> to vector<8x32xf32>
    %59 = vector.extract_strided_slice %54 {offsets = [0, 96], sizes = [8, 32], strides = [1, 1]} : vector<8x128xf32> to vector<8x32xf32>
    %60 = arith.mulf %57, %41 : vector<8x32xf32>
    %61 = arith.mulf %56, %58 : vector<8x32xf32>
    %62 = arith.addf %60, %61 : vector<8x32xf32>
    %63 = math.tanh %62 : vector<8x32xf32>
    %64 = arith.mulf %59, %63 : vector<8x32xf32>
    %c1_37 = arith.constant 1 : index
    %c0_38 = arith.constant 0 : index
    %c0_39 = arith.constant 0 : index
    %65 = vector.load %arg8[%c1_37, %c0_38, %c0_39] : memref<2x8x32xf32, #tpu.memory_space<vmem>>, vector<1x8x32xf32>
    %66 = vector.shape_cast %65 : vector<1x8x32xf32> to vector<8x32xf32>
    %67 = vector.shape_cast %64 : vector<8x32xf32> to vector<1x8x32xf32>
    tpu.vector_store %arg8[%c1_37, %c0_38, %c0_39], %67 {strides = array<i32>} : memref<2x8x32xf32, #tpu.memory_space<vmem>>, vector<1x8x32xf32>,
    %c1_40 = arith.constant 1 : index
    %c0_41 = arith.constant 0 : index
    %c0_42 = arith.constant 0 : index
    %68 = vector.load %arg9[%c1_40, %c0_41, %c0_42] : memref<2x8x32xf32, #tpu.memory_space<vmem>>, vector<1x8x32xf32>
    %69 = vector.shape_cast %68 : vector<1x8x32xf32> to vector<8x32xf32>
    %70 = vector.shape_cast %62 : vector<8x32xf32> to vector<1x8x32xf32>
    tpu.vector_store %arg9[%c1_40, %c0_41, %c0_42], %70 {strides = array<i32>} : memref<2x8x32xf32, #tpu.memory_space<vmem>>, vector<1x8x32xf32>,
    return
  }
  func.func @transform_0(%arg0: i32) -> (i32, i32, i32) {
    %c0_i32 = arith.constant 0 : i32
    %c0_i32_0 = arith.constant 0 : i32
    %c0_i32_1 = arith.constant 0 : i32
    return %arg0, %c0_i32, %c0_i32_0 : i32, i32, i32
  }
  func.func @transform_1(%arg0: i32) -> (i32, i32) {
    %c0_i32 = arith.constant 0 : i32
    %c0_i32_0 = arith.constant 0 : i32
    %c0_i32_1 = arith.constant 0 : i32
    return %c0_i32, %c0_i32_0 : i32, i32
  }
  func.func @transform_2(%arg0: i32) -> (i32, i32) {
    %c0_i32 = arith.constant 0 : i32
    %c0_i32_0 = arith.constant 0 : i32
    %c0_i32_1 = arith.constant 0 : i32
    return %c0_i32, %c0_i32_0 : i32, i32
  }
  func.func @transform_3(%arg0: i32) -> (i32, i32) {
    %c0_i32 = arith.constant 0 : i32
    %c0_i32_0 = arith.constant 0 : i32
    %c0_i32_1 = arith.constant 0 : i32
    return %c0_i32, %c0_i32_0 : i32, i32
  }
  func.func @transform_4(%arg0: i32) -> (i32, i32) {
    %c0_i32 = arith.constant 0 : i32
    %c0_i32_0 = arith.constant 0 : i32
    %c0_i32_1 = arith.constant 0 : i32
    return %c0_i32, %c0_i32_0 : i32, i32
  }
  func.func @transform_5(%arg0: i32) -> (i32, i32) {
    %c0_i32 = arith.constant 0 : i32
    %c0_i32_0 = arith.constant 0 : i32
    %c0_i32_1 = arith.constant 0 : i32
    return %c0_i32, %c0_i32_0 : i32, i32
  }
  func.func @transform_6(%arg0: i32) -> (i32, i32) {
    %c0_i32 = arith.constant 0 : i32
    %c0_i32_0 = arith.constant 0 : i32
    %c0_i32_1 = arith.constant 0 : i32
    return %c0_i32, %c0_i32_0 : i32, i32
  }
  func.func @transform_7(%arg0: i32) -> (i32, i32, i32) {
    %c0_i32 = arith.constant 0 : i32
    %c0_i32_0 = arith.constant 0 : i32
    %c0_i32_1 = arith.constant 0 : i32
    %c0_i32_2 = arith.constant 0 : i32
    return %c0_i32, %c0_i32_0, %c0_i32_1 : i32, i32, i32
  }
  func.func @transform_8(%arg0: i32) -> (i32, i32, i32) {
    %c0_i32 = arith.constant 0 : i32
    %c0_i32_0 = arith.constant 0 : i32
    %c0_i32_1 = arith.constant 0 : i32
    %c0_i32_2 = arith.constant 0 : i32
    return %c0_i32, %c0_i32_0, %c0_i32_1 : i32, i32, i32
  }
}

module attributes {stable_mosaic.version = 11 : i64} {
  func.func @kernel(%arg0: i32, %arg1: memref<7xi32, #tpu.memory_space<smem>>, %arg2: memref<1x8x32xf32, #tpu.memory_space<vmem>>, %arg3: memref<2x8x32xf32, #tpu.memory_space<vmem>>, %arg4: memref<2x8x32xf32, #tpu.memory_space<vmem>>, %arg5: memref<32x128xf32, #tpu.memory_space<vmem>>, %arg6: memref<32x128xf32, #tpu.memory_space<vmem>>, %arg7: memref<32x128xf32, #tpu.memory_space<vmem>>, %arg8: memref<32x128xf32, #tpu.memory_space<vmem>>, %arg9: memref<1x128xf32, #tpu.memory_space<vmem>>, %arg10: memref<1x128xf32, #tpu.memory_space<vmem>>, %arg11: memref<32x32xf32, #tpu.memory_space<vmem>>, %arg12: memref<1x32xf32, #tpu.memory_space<vmem>>, %arg13: memref<1x8x32xf32, #tpu.memory_space<vmem>>, %arg14: memref<2x8x32xf32, #tpu.memory_space<vmem>>, %arg15: memref<2x8x32xf32, #tpu.memory_space<vmem>>, %arg16: memref<8x32xf32, #tpu.memory_space<vmem>>) attributes {dimension_semantics = [#tpu.dimension_semantics<arbitrary>], iteration_bounds = array<i64: 7>, scalar_prefetch = 1 : i64, scratch_operands = 3 : i64, tpu.core_type = #tpu.core_type<tc>, window_params = [{transform_indices = @transform_0, window_bounds = array<i64: 1, 8, 32>}, {pipeline_mode = #tpu.pipeline_mode<synchronous>, transform_indices = @transform_1, window_bounds = array<i64: 2, 8, 32>}, {pipeline_mode = #tpu.pipeline_mode<synchronous>, transform_indices = @transform_2, window_bounds = array<i64: 2, 8, 32>}, {pipeline_mode = #tpu.pipeline_mode<synchronous>, transform_indices = @transform_3, window_bounds = array<i64: 32, 128>}, {pipeline_mode = #tpu.pipeline_mode<synchronous>, transform_indices = @transform_4, window_bounds = array<i64: 32, 128>}, {pipeline_mode = #tpu.pipeline_mode<synchronous>, transform_indices = @transform_5, window_bounds = array<i64: 32, 128>}, {pipeline_mode = #tpu.pipeline_mode<synchronous>, transform_indices = @transform_6, window_bounds = array<i64: 32, 128>}, {pipeline_mode = #tpu.pipeline_mode<synchronous>, transform_indices = @transform_7, window_bounds = array<i64: 1, 128>}, {pipeline_mode = #tpu.pipeline_mode<synchronous>, transform_indices = @transform_8, window_bounds = array<i64: 1, 128>}, {pipeline_mode = #tpu.pipeline_mode<synchronous>, transform_indices = @transform_9, window_bounds = array<i64: 32, 32>}, {pipeline_mode = #tpu.pipeline_mode<synchronous>, transform_indices = @transform_10, window_bounds = array<i64: 1, 32>}, {transform_indices = @transform_11, window_bounds = array<i64: 1, 8, 32>}]} {
    %c0_i32 = arith.constant 0 : i32
    %0 = arith.cmpi eq, %arg0, %c0_i32 : i32
    %1 = arith.extui %0 : i1 to i32
    %c0_i32_0 = arith.constant 0 : i32
    %2 = arith.cmpi ne, %1, %c0_i32_0 : i32
    scf.if %2 {
      %c0 = arith.constant 0 : index
      %c0_3 = arith.constant 0 : index
      %c0_4 = arith.constant 0 : index
      %6 = vector.load %arg3[%c0, %c0_3, %c0_4] : memref<2x8x32xf32, #tpu.memory_space<vmem>>, vector<2x8x32xf32>
      %c0_5 = arith.constant 0 : index
      %c0_6 = arith.constant 0 : index
      %c0_7 = arith.constant 0 : index
      %7 = vector.load %arg14[%c0_5, %c0_6, %c0_7] : memref<2x8x32xf32, #tpu.memory_space<vmem>>, vector<2x8x32xf32>
      tpu.vector_store %arg14[%c0_5, %c0_6, %c0_7], %6 {strides = array<i32>} : memref<2x8x32xf32, #tpu.memory_space<vmem>>, vector<2x8x32xf32>,
      %c0_8 = arith.constant 0 : index
      %c0_9 = arith.constant 0 : index
      %c0_10 = arith.constant 0 : index
      %8 = vector.load %arg4[%c0_8, %c0_9, %c0_10] : memref<2x8x32xf32, #tpu.memory_space<vmem>>, vector<2x8x32xf32>
      %c0_11 = arith.constant 0 : index
      %c0_12 = arith.constant 0 : index
      %c0_13 = arith.constant 0 : index
      %9 = vector.load %arg15[%c0_11, %c0_12, %c0_13] : memref<2x8x32xf32, #tpu.memory_space<vmem>>, vector<2x8x32xf32>
      tpu.vector_store %arg15[%c0_11, %c0_12, %c0_13], %8 {strides = array<i32>} : memref<2x8x32xf32, #tpu.memory_space<vmem>>, vector<2x8x32xf32>,
      %c0_14 = arith.constant 0 : index
      %c0_15 = arith.constant 0 : index
      %c0_16 = arith.constant 0 : index
      %10 = vector.load %arg2[%c0_14, %c0_15, %c0_16] : memref<1x8x32xf32, #tpu.memory_space<vmem>>, vector<1x8x32xf32>
      %11 = vector.shape_cast %10 : vector<1x8x32xf32> to vector<8x32xf32>
      %c0_17 = arith.constant 0 : index
      %c0_18 = arith.constant 0 : index
      %12 = vector.load %arg16[%c0_17, %c0_18] : memref<8x32xf32, #tpu.memory_space<vmem>>, vector<8x32xf32>
      tpu.vector_store %arg16[%c0_17, %c0_18], %11 {strides = array<i32>} : memref<8x32xf32, #tpu.memory_space<vmem>>, vector<8x32xf32>,
      %cst = arith.constant 0.000000e+00 : f32
      %13 = vector.broadcast %cst : f32 to vector<1x8x32xf32>
      %c0_19 = arith.constant 0 : index
      %c0_20 = arith.constant 0 : index
      %c0_21 = arith.constant 0 : index
      %14 = vector.load %arg13[%c0_19, %c0_20, %c0_21] : memref<1x8x32xf32, #tpu.memory_space<vmem>>, vector<1x8x32xf32>
      tpu.vector_store %arg13[%c0_19, %c0_20, %c0_21], %13 {strides = array<i32>} : memref<1x8x32xf32, #tpu.memory_space<vmem>>, vector<1x8x32xf32>,
    } else {
    }
    %c0_i32_1 = arith.constant 0 : i32
    %3 = arith.cmpi sgt, %arg0, %c0_i32_1 : i32
    %4 = arith.extui %3 : i1 to i32
    %c0_i32_2 = arith.constant 0 : i32
    %5 = arith.cmpi ne, %4, %c0_i32_2 : i32
    scf.if %5 {
      %c0 = arith.constant 0 : index
      %c0_3 = arith.constant 0 : index
      %6 = vector.load %arg16[%c0, %c0_3] : memref<8x32xf32, #tpu.memory_space<vmem>>, vector<8x32xf32>
      %c0_4 = arith.constant 0 : index
      %c0_5 = arith.constant 0 : index
      %c0_6 = arith.constant 0 : index
      %7 = vector.load %arg14[%c0_4, %c0_5, %c0_6] : memref<2x8x32xf32, #tpu.memory_space<vmem>>, vector<1x8x32xf32>
      %8 = vector.shape_cast %7 : vector<1x8x32xf32> to vector<8x32xf32>
      %c0_7 = arith.constant 0 : index
      %c0_8 = arith.constant 0 : index
      %c0_9 = arith.constant 0 : index
      %9 = vector.load %arg15[%c0_7, %c0_8, %c0_9] : memref<2x8x32xf32, #tpu.memory_space<vmem>>, vector<1x8x32xf32>
      %10 = vector.shape_cast %9 : vector<1x8x32xf32> to vector<8x32xf32>
      %c0_10 = arith.constant 0 : index
      %c0_11 = arith.constant 0 : index
      %11 = vector.load %arg5[%c0_10, %c0_11] : memref<32x128xf32, #tpu.memory_space<vmem>>, vector<32x128xf32>
      %cst = arith.constant dense<0.000000e+00> : vector<8x128xf32>
      %12 = tpu.matmul %6, %11, %cst {dimension_numbers = #tpu.dot_dimension_numbers<[1], [0], [0], [1], [0, 0, 1, 1], [], []>} : vector<8x32xf32>, vector<32x128xf32>, vector<8x128xf32> -> vector<8x128xf32>
      %c0_12 = arith.constant 0 : index
      %c0_13 = arith.constant 0 : index
      %13 = vector.load %arg7[%c0_12, %c0_13] : memref<32x128xf32, #tpu.memory_space<vmem>>, vector<32x128xf32>
      %cst_14 = arith.constant dense<0.000000e+00> : vector<8x128xf32>
      %14 = tpu.matmul %8, %13, %cst_14 {dimension_numbers = #tpu.dot_dimension_numbers<[1], [0], [0], [1], [0, 0, 1, 1], [], []>} : vector<8x32xf32>, vector<32x128xf32>, vector<8x128xf32> -> vector<8x128xf32>
      %15 = arith.addf %12, %14 : vector<8x128xf32>
      %c0_15 = arith.constant 0 : index
      %c0_16 = arith.constant 0 : index
      %16 = vector.load %arg9[%c0_15, %c0_16] : memref<1x128xf32, #tpu.memory_space<vmem>>, vector<1x128xf32>
      %17 = vector.broadcast %16 : vector<1x128xf32> to vector<8x128xf32>
      %18 = arith.addf %15, %17 : vector<8x128xf32>
      %19 = arith.negf %18 : vector<8x128xf32>
      %20 = math.exp %19 : vector<8x128xf32>
      %cst_17 = arith.constant 1.000000e+00 : f32
      %21 = vector.broadcast %cst_17 : f32 to vector<8x128xf32>
      %22 = arith.addf %21, %20 : vector<8x128xf32>
      %23 = arith.divf %21, %22 : vector<8x128xf32>
      %24 = math.tanh %18 : vector<8x128xf32>
      %25 = vector.extract_strided_slice %23 {offsets = [0, 0], sizes = [8, 32], strides = [1, 1]} : vector<8x128xf32> to vector<8x32xf32>
      %26 = vector.extract_strided_slice %23 {offsets = [0, 32], sizes = [8, 32], strides = [1, 1]} : vector<8x128xf32> to vector<8x32xf32>
      %27 = vector.extract_strided_slice %24 {offsets = [0, 64], sizes = [8, 32], strides = [1, 1]} : vector<8x128xf32> to vector<8x32xf32>
      %28 = vector.extract_strided_slice %23 {offsets = [0, 96], sizes = [8, 32], strides = [1, 1]} : vector<8x128xf32> to vector<8x32xf32>
      %29 = arith.mulf %26, %10 : vector<8x32xf32>
      %30 = arith.mulf %25, %27 : vector<8x32xf32>
      %31 = arith.addf %29, %30 : vector<8x32xf32>
      %32 = math.tanh %31 : vector<8x32xf32>
      %33 = arith.mulf %28, %32 : vector<8x32xf32>
      %c0_18 = arith.constant 0 : index
      %c0_19 = arith.constant 0 : index
      %c0_20 = arith.constant 0 : index
      %34 = vector.load %arg14[%c0_18, %c0_19, %c0_20] : memref<2x8x32xf32, #tpu.memory_space<vmem>>, vector<1x8x32xf32>
      %35 = vector.shape_cast %34 : vector<1x8x32xf32> to vector<8x32xf32>
      %36 = vector.shape_cast %33 : vector<8x32xf32> to vector<1x8x32xf32>
      tpu.vector_store %arg14[%c0_18, %c0_19, %c0_20], %36 {strides = array<i32>} : memref<2x8x32xf32, #tpu.memory_space<vmem>>, vector<1x8x32xf32>,
      %c0_21 = arith.constant 0 : index
      %c0_22 = arith.constant 0 : index
      %c0_23 = arith.constant 0 : index
      %37 = vector.load %arg15[%c0_21, %c0_22, %c0_23] : memref<2x8x32xf32, #tpu.memory_space<vmem>>, vector<1x8x32xf32>
      %38 = vector.shape_cast %37 : vector<1x8x32xf32> to vector<8x32xf32>
      %39 = vector.shape_cast %31 : vector<8x32xf32> to vector<1x8x32xf32>
      tpu.vector_store %arg15[%c0_21, %c0_22, %c0_23], %39 {strides = array<i32>} : memref<2x8x32xf32, #tpu.memory_space<vmem>>, vector<1x8x32xf32>,
      %c1 = arith.constant 1 : index
      %c0_24 = arith.constant 0 : index
      %c0_25 = arith.constant 0 : index
      %40 = vector.load %arg14[%c1, %c0_24, %c0_25] : memref<2x8x32xf32, #tpu.memory_space<vmem>>, vector<1x8x32xf32>
      %41 = vector.shape_cast %40 : vector<1x8x32xf32> to vector<8x32xf32>
      %c1_26 = arith.constant 1 : index
      %c0_27 = arith.constant 0 : index
      %c0_28 = arith.constant 0 : index
      %42 = vector.load %arg15[%c1_26, %c0_27, %c0_28] : memref<2x8x32xf32, #tpu.memory_space<vmem>>, vector<1x8x32xf32>
      %43 = vector.shape_cast %42 : vector<1x8x32xf32> to vector<8x32xf32>
      %c0_29 = arith.constant 0 : index
      %c0_30 = arith.constant 0 : index
      %44 = vector.load %arg6[%c0_29, %c0_30] : memref<32x128xf32, #tpu.memory_space<vmem>>, vector<32x128xf32>
      %cst_31 = arith.constant dense<0.000000e+00> : vector<8x128xf32>
      %45 = tpu.matmul %33, %44, %cst_31 {dimension_numbers = #tpu.dot_dimension_numbers<[1], [0], [0], [1], [0, 0, 1, 1], [], []>} : vector<8x32xf32>, vector<32x128xf32>, vector<8x128xf32> -> vector<8x128xf32>
      %c0_32 = arith.constant 0 : index
      %c0_33 = arith.constant 0 : index
      %46 = vector.load %arg8[%c0_32, %c0_33] : memref<32x128xf32, #tpu.memory_space<vmem>>, vector<32x128xf32>
      %cst_34 = arith.constant dense<0.000000e+00> : vector<8x128xf32>
      %47 = tpu.matmul %41, %46, %cst_34 {dimension_numbers = #tpu.dot_dimension_numbers<[1], [0], [0], [1], [0, 0, 1, 1], [], []>} : vector<8x32xf32>, vector<32x128xf32>, vector<8x128xf32> -> vector<8x128xf32>
      %48 = arith.addf %45, %47 : vector<8x128xf32>
      %c0_35 = arith.constant 0 : index
      %c0_36 = arith.constant 0 : index
      %49 = vector.load %arg10[%c0_35, %c0_36] : memref<1x128xf32, #tpu.memory_space<vmem>>, vector<1x128xf32>
      %50 = vector.broadcast %49 : vector<1x128xf32> to vector<8x128xf32>
      %51 = arith.addf %48, %50 : vector<8x128xf32>
      %52 = arith.negf %51 : vector<8x128xf32>
      %53 = math.exp %52 : vector<8x128xf32>
      %cst_37 = arith.constant 1.000000e+00 : f32
      %54 = vector.broadcast %cst_37 : f32 to vector<8x128xf32>
      %55 = arith.addf %54, %53 : vector<8x128xf32>
      %56 = arith.divf %54, %55 : vector<8x128xf32>
      %57 = math.tanh %51 : vector<8x128xf32>
      %58 = vector.extract_strided_slice %56 {offsets = [0, 0], sizes = [8, 32], strides = [1, 1]} : vector<8x128xf32> to vector<8x32xf32>
      %59 = vector.extract_strided_slice %56 {offsets = [0, 32], sizes = [8, 32], strides = [1, 1]} : vector<8x128xf32> to vector<8x32xf32>
      %60 = vector.extract_strided_slice %57 {offsets = [0, 64], sizes = [8, 32], strides = [1, 1]} : vector<8x128xf32> to vector<8x32xf32>
      %61 = vector.extract_strided_slice %56 {offsets = [0, 96], sizes = [8, 32], strides = [1, 1]} : vector<8x128xf32> to vector<8x32xf32>
      %62 = arith.mulf %59, %43 : vector<8x32xf32>
      %63 = arith.mulf %58, %60 : vector<8x32xf32>
      %64 = arith.addf %62, %63 : vector<8x32xf32>
      %65 = math.tanh %64 : vector<8x32xf32>
      %66 = arith.mulf %61, %65 : vector<8x32xf32>
      %c1_38 = arith.constant 1 : index
      %c0_39 = arith.constant 0 : index
      %c0_40 = arith.constant 0 : index
      %67 = vector.load %arg14[%c1_38, %c0_39, %c0_40] : memref<2x8x32xf32, #tpu.memory_space<vmem>>, vector<1x8x32xf32>
      %68 = vector.shape_cast %67 : vector<1x8x32xf32> to vector<8x32xf32>
      %69 = vector.shape_cast %66 : vector<8x32xf32> to vector<1x8x32xf32>
      tpu.vector_store %arg14[%c1_38, %c0_39, %c0_40], %69 {strides = array<i32>} : memref<2x8x32xf32, #tpu.memory_space<vmem>>, vector<1x8x32xf32>,
      %c1_41 = arith.constant 1 : index
      %c0_42 = arith.constant 0 : index
      %c0_43 = arith.constant 0 : index
      %70 = vector.load %arg15[%c1_41, %c0_42, %c0_43] : memref<2x8x32xf32, #tpu.memory_space<vmem>>, vector<1x8x32xf32>
      %71 = vector.shape_cast %70 : vector<1x8x32xf32> to vector<8x32xf32>
      %72 = vector.shape_cast %64 : vector<8x32xf32> to vector<1x8x32xf32>
      tpu.vector_store %arg15[%c1_41, %c0_42, %c0_43], %72 {strides = array<i32>} : memref<2x8x32xf32, #tpu.memory_space<vmem>>, vector<1x8x32xf32>,
      %c0_44 = arith.constant 0 : index
      %c0_45 = arith.constant 0 : index
      %73 = vector.load %arg11[%c0_44, %c0_45] : memref<32x32xf32, #tpu.memory_space<vmem>>, vector<32x32xf32>
      %cst_46 = arith.constant dense<0.000000e+00> : vector<8x32xf32>
      %74 = tpu.matmul %66, %73, %cst_46 {dimension_numbers = #tpu.dot_dimension_numbers<[1], [0], [0], [1], [0, 0, 1, 1], [], []>} : vector<8x32xf32>, vector<32x32xf32>, vector<8x32xf32> -> vector<8x32xf32>
      %c0_47 = arith.constant 0 : index
      %c0_48 = arith.constant 0 : index
      %75 = vector.load %arg12[%c0_47, %c0_48] : memref<1x32xf32, #tpu.memory_space<vmem>>, vector<1x32xf32>
      %76 = vector.broadcast %75 : vector<1x32xf32> to vector<8x32xf32>
      %77 = arith.addf %74, %76 : vector<8x32xf32>
      %c0_49 = arith.constant 0 : index
      %c0_50 = arith.constant 0 : index
      %c0_51 = arith.constant 0 : index
      %78 = vector.load %arg13[%c0_49, %c0_50, %c0_51] : memref<1x8x32xf32, #tpu.memory_space<vmem>>, vector<1x8x32xf32>
      %79 = vector.shape_cast %78 : vector<1x8x32xf32> to vector<8x32xf32>
      %80 = vector.shape_cast %77 : vector<8x32xf32> to vector<1x8x32xf32>
      tpu.vector_store %arg13[%c0_49, %c0_50, %c0_51], %80 {strides = array<i32>} : memref<1x8x32xf32, #tpu.memory_space<vmem>>, vector<1x8x32xf32>,
      %81 = tpu.iota {dimensions = array<i32: 1>} : vector<8x32xi32>
      %82 = arith.sitofp %81 : vector<8x32xi32> to vector<8x32xf32>
      %cst_52 = arith.constant dense<0xFF800000> : vector<8xf32>
      %83 = vector.multi_reduction <maximumf>, %77, %cst_52 [1] : vector<8x32xf32> to vector<8xf32>
      %84 = vector.shape_cast %83 : vector<8xf32> to vector<8x1xf32>
      %85 = vector.broadcast %84 : vector<8x1xf32> to vector<8x32xf32>
      %86 = arith.cmpf oeq, %77, %85 : vector<8x32xf32>
      %cst_53 = arith.constant 3.200000e+01 : f32
      %87 = vector.broadcast %cst_53 : f32 to vector<8x32xf32>
      %88 = arith.select %86, %82, %87 : vector<8x32xi1>, vector<8x32xf32>
      %cst_54 = arith.constant dense<0x7F800000> : vector<8xf32>
      %89 = vector.multi_reduction <minimumf>, %88, %cst_54 [1] : vector<8x32xf32> to vector<8xf32>
      %90 = vector.shape_cast %89 : vector<8xf32> to vector<8x1xf32>
      %91 = vector.broadcast %90 : vector<8x1xf32> to vector<8x32xf32>
      %92 = arith.cmpf oeq, %82, %91 : vector<8x32xf32>
      %93 = arith.extui %92 : vector<8x32xi1> to vector<8x32xi32>
      %94 = arith.sitofp %93 : vector<8x32xi32> to vector<8x32xf32>
      %95 = arith.index_cast %arg0 : i32 to index
      %96 = memref.load %arg1[%95] : memref<7xi32, #tpu.memory_space<smem>>
      %c1_i32 = arith.constant 1 : i32
      %97 = arith.cmpi eq, %96, %c1_i32 : i32
      %98 = arith.extui %97 : i1 to i32
      %99 = arith.sitofp %98 : i32 to f32
      %c0_55 = arith.constant 0 : index
      %c0_56 = arith.constant 0 : index
      %c0_57 = arith.constant 0 : index
      %100 = vector.load %arg2[%c0_55, %c0_56, %c0_57] : memref<1x8x32xf32, #tpu.memory_space<vmem>>, vector<1x8x32xf32>
      %101 = vector.shape_cast %100 : vector<1x8x32xf32> to vector<8x32xf32>
      %102 = vector.broadcast %99 : f32 to vector<8x32xf32>
      %103 = arith.mulf %102, %101 : vector<8x32xf32>
      %cst_58 = arith.constant 1.000000e+00 : f32
      %104 = arith.subf %cst_58, %99 : f32
      %105 = vector.broadcast %104 : f32 to vector<8x32xf32>
      %106 = arith.mulf %105, %94 : vector<8x32xf32>
      %107 = arith.addf %103, %106 : vector<8x32xf32>
      %c0_59 = arith.constant 0 : index
      %c0_60 = arith.constant 0 : index
      %108 = vector.load %arg16[%c0_59, %c0_60] : memref<8x32xf32, #tpu.memory_space<vmem>>, vector<8x32xf32>
      tpu.vector_store %arg16[%c0_59, %c0_60], %107 {strides = array<i32>} : memref<8x32xf32, #tpu.memory_space<vmem>>, vector<8x32xf32>,
    } else {
    }
    return
  }
  func.func @transform_0(%arg0: i32, %arg1: memref<7xi32, #tpu.memory_space<smem>>) -> (i32, i32, i32) {
    %c0_i32 = arith.constant 0 : i32
    %c0_i32_0 = arith.constant 0 : i32
    %c0_i32_1 = arith.constant 0 : i32
    return %arg0, %c0_i32, %c0_i32_0 : i32, i32, i32
  }
  func.func @transform_1(%arg0: i32, %arg1: memref<7xi32, #tpu.memory_space<smem>>) -> (i32, i32, i32) {
    %c0_i32 = arith.constant 0 : i32
    %c0_i32_0 = arith.constant 0 : i32
    %c0_i32_1 = arith.constant 0 : i32
    %c0_i32_2 = arith.constant 0 : i32
    return %c0_i32, %c0_i32_0, %c0_i32_1 : i32, i32, i32
  }
  func.func @transform_2(%arg0: i32, %arg1: memref<7xi32, #tpu.memory_space<smem>>) -> (i32, i32, i32) {
    %c0_i32 = arith.constant 0 : i32
    %c0_i32_0 = arith.constant 0 : i32
    %c0_i32_1 = arith.constant 0 : i32
    %c0_i32_2 = arith.constant 0 : i32
    return %c0_i32, %c0_i32_0, %c0_i32_1 : i32, i32, i32
  }
  func.func @transform_3(%arg0: i32, %arg1: memref<7xi32, #tpu.memory_space<smem>>) -> (i32, i32) {
    %c0_i32 = arith.constant 0 : i32
    %c0_i32_0 = arith.constant 0 : i32
    %c0_i32_1 = arith.constant 0 : i32
    return %c0_i32, %c0_i32_0 : i32, i32
  }
  func.func @transform_4(%arg0: i32, %arg1: memref<7xi32, #tpu.memory_space<smem>>) -> (i32, i32) {
    %c0_i32 = arith.constant 0 : i32
    %c0_i32_0 = arith.constant 0 : i32
    %c0_i32_1 = arith.constant 0 : i32
    return %c0_i32, %c0_i32_0 : i32, i32
  }
  func.func @transform_5(%arg0: i32, %arg1: memref<7xi32, #tpu.memory_space<smem>>) -> (i32, i32) {
    %c0_i32 = arith.constant 0 : i32
    %c0_i32_0 = arith.constant 0 : i32
    %c0_i32_1 = arith.constant 0 : i32
    return %c0_i32, %c0_i32_0 : i32, i32
  }
  func.func @transform_6(%arg0: i32, %arg1: memref<7xi32, #tpu.memory_space<smem>>) -> (i32, i32) {
    %c0_i32 = arith.constant 0 : i32
    %c0_i32_0 = arith.constant 0 : i32
    %c0_i32_1 = arith.constant 0 : i32
    return %c0_i32, %c0_i32_0 : i32, i32
  }
  func.func @transform_7(%arg0: i32, %arg1: memref<7xi32, #tpu.memory_space<smem>>) -> (i32, i32) {
    %c0_i32 = arith.constant 0 : i32
    %c0_i32_0 = arith.constant 0 : i32
    %c0_i32_1 = arith.constant 0 : i32
    return %c0_i32, %c0_i32_0 : i32, i32
  }
  func.func @transform_8(%arg0: i32, %arg1: memref<7xi32, #tpu.memory_space<smem>>) -> (i32, i32) {
    %c0_i32 = arith.constant 0 : i32
    %c0_i32_0 = arith.constant 0 : i32
    %c0_i32_1 = arith.constant 0 : i32
    return %c0_i32, %c0_i32_0 : i32, i32
  }
  func.func @transform_9(%arg0: i32, %arg1: memref<7xi32, #tpu.memory_space<smem>>) -> (i32, i32) {
    %c0_i32 = arith.constant 0 : i32
    %c0_i32_0 = arith.constant 0 : i32
    %c0_i32_1 = arith.constant 0 : i32
    return %c0_i32, %c0_i32_0 : i32, i32
  }
  func.func @transform_10(%arg0: i32, %arg1: memref<7xi32, #tpu.memory_space<smem>>) -> (i32, i32) {
    %c0_i32 = arith.constant 0 : i32
    %c0_i32_0 = arith.constant 0 : i32
    %c0_i32_1 = arith.constant 0 : i32
    return %c0_i32, %c0_i32_0 : i32, i32
  }
  func.func @transform_11(%arg0: i32, %arg1: memref<7xi32, #tpu.memory_space<smem>>) -> (i32, i32, i32) {
    %c0_i32 = arith.constant 0 : i32
    %c0_i32_0 = arith.constant 0 : i32
    %c0_i32_1 = arith.constant 0 : i32
    return %arg0, %c0_i32, %c0_i32_0 : i32, i32, i32
  }
}

</mosaic_0001>

<llo_original>
// kernel: seq2seq_forward.2
$region0: #{seq2seq_forward.2}
  #allocation0 [shape = 'u32[]', space=smem, size = 0x4, offset = 0x4, fixed_abs, tag = 'smem constant byte address 0x4 - core index']
  #allocation1 [shape = 'u32[144,128]{1,0:T(1,128)}', space=vmem, size = 0x12000, scoped, tag = 'internal scratch']
  %s0 = inlined_call_operand.vmem [shape: f32[6,8,16], index: 0, kind: input, shape index: {}]
  %s1 = inlined_call_operand.vmem [shape: f32[16,128], index: 1, kind: input, shape index: {}]
  %s2 = inlined_call_operand.vmem [shape: f32[32,128], index: 2, kind: input, shape index: {}]
  %s3 = inlined_call_operand.vmem [shape: f32[32,128], index: 3, kind: input, shape index: {}]
  %s4 = inlined_call_operand.vmem [shape: f32[32,128], index: 4, kind: input, shape index: {}]
  %s5 = inlined_call_operand.vmem [shape: f32[1,128], index: 5, kind: input, shape index: {}]
  %s6 = inlined_call_operand.vmem [shape: f32[1,128], index: 6, kind: input, shape index: {}]
  %s7 = inlined_call_operand.vmem [shape: f32[2,8,32], index: 7, kind: output, shape index: {0}]
  %s8 = inlined_call_operand.vmem [shape: f32[2,8,32], index: 8, kind: output, shape index: {1}]
  %9 = xla_tuple %s7, %s8
  %s10 = sld [smem:[#allocation0]]
  $region73: #{seq2seq_forward.2} parent=0
    _
  %s12 = ssub.s32 1, %s10
  %s13 = scalar_select 0, %s12, %s10
  loop: start=0, step=1, limit=8
  $region2: #{seq2seq_forward.2} parent=0 // loop_pre_header
    _
  $region3: #{seq2seq_forward.2} parent=0 // loop_header
    %s15 = sphi 0, %s19
    %p16 = scmp.ge.s32.totalorder %s15, 8
    %s25 = sphi 0, %s27
    %s28 = sphi 0, %s25
    %s29 = sphi 0, %s28
    %s45 = sphi 0, %s29
    %s49 = sphi 0, %s49
    %s51 = sphi 0, %s49
    %s52 = sphi 0, %s51
    %s66 = sphi 0, %s52
    %s70 = sphi 0, %s70
    %s72 = sphi 0, %s70
    %s73 = sphi 0, %s72
    %s87 = sphi 0, %s73
    %s91 = sphi 0, %s91
    %s93 = sphi 0, %s91
    %s94 = sphi 0, %s93
    %s108 = sphi 0, %s94
    %s112 = sphi 0, %s112
    %s114 = sphi 0, %s112
    %s115 = sphi 0, %s114
    %s129 = sphi 0, %s115
    %s133 = sphi 0, %s133
    %s135 = sphi 0, %s133
    %s136 = sphi 0, %s135
    %s150 = sphi 0, %s136
    %s154 = sphi 0, %s154
    %s156 = sphi 0, %s154
    %s157 = sphi 0, %s156
    %s171 = sphi 0, %s157
    %s175 = sphi 0, %s175
    %s177 = sphi 0, %s175
    %s178 = sphi 0, %s177
    %s192 = sphi 0, %s178
    %s196 = sphi 0, %s196
    %s198 = sphi 0, %s196
    %s199 = sphi 0, %s198
    %s213 = sphi 0, %s199
  $region4: #{seq2seq_forward.2} parent=0 // loop_header_branch
    %18 = sbr.rel (%p16) target = $region8
  $region5: #{seq2seq_forward.2} parent=0 // loop_body
    %s20 = ssub.s32 %s15, 1
    %s21 = ssub.s32 %s15, 2
    %s22 = sadd.s32 %s15, 1
    %s23 = ssub.s32 %s15, %s22
    %p24 = scmp.eq.s32.totalorder %s23, 0
    %s26 = sadd.s32 %s25, 1
    %s27 = scalar_select %p24, %s25, %s26
    %p30 = pneg %p24
    %p31 = scmp.eq.s32.totalorder %s15, 5
    %p32 = por %p30, %p31
    %p33 = scmp.ne.s32.totalorder %s25, %s28
    %p34 = scmp.eq.s32.totalorder %s15, 0
    %p35 = por %p33, %p34
    %p36 = scmp.ne.s32.totalorder %s25, %s28
    %p37 = scmp.eq.s32.totalorder %s20, 5
    %p38 = por %p36, %p37
    %p39 = scmp.ne.s32.totalorder %s28, %s29
    %p40 = scmp.eq.s32.totalorder %s20, 0
    %p41 = por %p39, %p40
    %p42 = scmp.ne.s32.totalorder %s28, %s29
    %p43 = scmp.eq.s32.totalorder %s21, 5
    %p44 = por %p42, %p43
    %p46 = scmp.ne.s32.totalorder %s29, %s45
    %p47 = scmp.eq.s32.totalorder %s21, 0
    %p48 = por %p46, %p47
    %s50 = sadd.s32 %s49, 1
    %p53 = scmp.eq.s32.totalorder %s15, 5
    %p54 = scmp.ne.s32.totalorder %s49, %s51
    %p55 = scmp.eq.s32.totalorder %s15, 0
    %p56 = por %p54, %p55
    %p57 = scmp.ne.s32.totalorder %s49, %s51
    %p58 = scmp.eq.s32.totalorder %s20, 5
    %p59 = por %p57, %p58
    %p60 = scmp.ne.s32.totalorder %s51, %s52
    %p61 = scmp.eq.s32.totalorder %s20, 0
    %p62 = por %p60, %p61
    %p63 = scmp.ne.s32.totalorder %s51, %s52
    %p64 = scmp.eq.s32.totalorder %s21, 5
    %p65 = por %p63, %p64
    %p67 = scmp.ne.s32.totalorder %s52, %s66
    %p68 = scmp.eq.s32.totalorder %s21, 0
    %p69 = por %p67, %p68
    %s71 = sadd.s32 %s70, 1
    %p74 = scmp.eq.s32.totalorder %s15, 5
    %p75 = scmp.ne.s32.totalorder %s70, %s72
    %p76 = scmp.eq.s32.totalorder %s15, 0
    %p77 = por %p75, %p76
    %p78 = scmp.ne.s32.totalorder %s70, %s72
    %p79 = scmp.eq.s32.totalorder %s20, 5
    %p80 = por %p78, %p79
    %p81 = scmp.ne.s32.totalorder %s72, %s73
    %p82 = scmp.eq.s32.totalorder %s20, 0
    %p83 = por %p81, %p82
    %p84 = scmp.ne.s32.totalorder %s72, %s73
    %p85 = scmp.eq.s32.totalorder %s21, 5
    %p86 = por %p84, %p85
    %p88 = scmp.ne.s32.totalorder %s73, %s87
    %p89 = scmp.eq.s32.totalorder %s21, 0
    %p90 = por %p88, %p89
    %s92 = sadd.s32 %s91, 1
    %p95 = scmp.eq.s32.totalorder %s15, 5
    %p96 = scmp.ne.s32.totalorder %s91, %s93
    %p97 = scmp.eq.s32.totalorder %s15, 0
    %p98 = por %p96, %p97
    %p99 = scmp.ne.s32.totalorder %s91, %s93
    %p100 = scmp.eq.s32.totalorder %s20, 5
    %p101 = por %p99, %p100
    %p102 = scmp.ne.s32.totalorder %s93, %s94
    %p103 = scmp.eq.s32.totalorder %s20, 0
    %p104 = por %p102, %p103
    %p105 = scmp.ne.s32.totalorder %s93, %s94
    %p106 = scmp.eq.s32.totalorder %s21, 5
    %p107 = por %p105, %p106
    %p109 = scmp.ne.s32.totalorder %s94, %s108
    %p110 = scmp.eq.s32.totalorder %s21, 0
    %p111 = por %p109, %p110
    %s113 = sadd.s32 %s112, 1
    %p116 = scmp.eq.s32.totalorder %s15, 5
    %p117 = scmp.ne.s32.totalorder %s112, %s114
    %p118 = scmp.eq.s32.totalorder %s15, 0
    %p119 = por %p117, %p118
    %p120 = scmp.ne.s32.totalorder %s112, %s114
    %p121 = scmp.eq.s32.totalorder %s20, 5
    %p122 = por %p120, %p121
    %p123 = scmp.ne.s32.totalorder %s114, %s115
    %p124 = scmp.eq.s32.totalorder %s20, 0
    %p125 = por %p123, %p124
    %p126 = scmp.ne.s32.totalorder %s114, %s115
    %p127 = scmp.eq.s32.totalorder %s21, 5
    %p128 = por %p126, %p127
    %p130 = scmp.ne.s32.totalorder %s115, %s129
    %p131 = scmp.eq.s32.totalorder %s21, 0
    %p132 = por %p130, %p131
    %s134 = sadd.s32 %s133, 1
    %p137 = scmp.eq.s32.totalorder %s15, 5
    %p138 = scmp.ne.s32.totalorder %s133, %s135
    %p139 = scmp.eq.s32.totalorder %s15, 0
    %p140 = por %p138, %p139
    %p141 = scmp.ne.s32.totalorder %s133, %s135
    %p142 = scmp.eq.s32.totalorder %s20, 5
    %p143 = por %p141, %p142
    %p144 = scmp.ne.s32.totalorder %s135, %s136
    %p145 = scmp.eq.s32.totalorder %s20, 0
    %p146 = por %p144, %p145
    %p147 = scmp.ne.s32.totalorder %s135, %s136
    %p148 = scmp.eq.s32.totalorder %s21, 5
    %p149 = por %p147, %p148
    %p151 = scmp.ne.s32.totalorder %s136, %s150
    %p152 = scmp.eq.s32.totalorder %s21, 0
    %p153 = por %p151, %p152
    %s155 = sadd.s32 %s154, 1
    %p158 = scmp.eq.s32.totalorder %s15, 5
    %p159 = scmp.ne.s32.totalorder %s154, %s156
    %p160 = scmp.eq.s32.totalorder %s15, 0
    %p161 = por %p159, %p160
    %p162 = scmp.ne.s32.totalorder %s154, %s156
    %p163 = scmp.eq.s32.totalorder %s20, 5
    %p164 = por %p162, %p163
    %p165 = scmp.ne.s32.totalorder %s156, %s157
    %p166 = scmp.eq.s32.totalorder %s20, 0
    %p167 = por %p165, %p166
    %p168 = scmp.ne.s32.totalorder %s156, %s157
    %p169 = scmp.eq.s32.totalorder %s21, 5
    %p170 = por %p168, %p169
    %p172 = scmp.ne.s32.totalorder %s157, %s171
    %p173 = scmp.eq.s32.totalorder %s21, 0
    %p174 = por %p172, %p173
    %s176 = sadd.s32 %s175, 1
    %p179 = scmp.eq.s32.totalorder %s15, 5
    %p180 = scmp.ne.s32.totalorder %s175, %s177
    %p181 = scmp.eq.s32.totalorder %s15, 0
    %p182 = por %p180, %p181
    %p183 = scmp.ne.s32.totalorder %s175, %s177
    %p184 = scmp.eq.s32.totalorder %s20, 5
    %p185 = por %p183, %p184
    %p186 = scmp.ne.s32.totalorder %s177, %s178
    %p187 = scmp.eq.s32.totalorder %s20, 0
    %p188 = por %p186, %p187
    %p189 = scmp.ne.s32.totalorder %s177, %s178
    %p190 = scmp.eq.s32.totalorder %s21, 5
    %p191 = por %p189, %p190
    %p193 = scmp.ne.s32.totalorder %s178, %s192
    %p194 = scmp.eq.s32.totalorder %s21, 0
    %p195 = por %p193, %p194
    %s197 = sadd.s32 %s196, 1
    %p200 = scmp.eq.s32.totalorder %s15, 5
    %p201 = scmp.ne.s32.totalorder %s196, %s198
    %p202 = scmp.eq.s32.totalorder %s15, 0
    %p203 = por %p201, %p202
    %p204 = scmp.ne.s32.totalorder %s196, %s198
    %p205 = scmp.eq.s32.totalorder %s20, 5
    %p206 = por %p204, %p205
    %p207 = scmp.ne.s32.totalorder %s198, %s199
    %p208 = scmp.eq.s32.totalorder %s20, 0
    %p209 = por %p207, %p208
    %p210 = scmp.ne.s32.totalorder %s198, %s199
    %p211 = scmp.eq.s32.totalorder %s21, 5
    %p212 = por %p210, %p211
    %p214 = scmp.ne.s32.totalorder %s199, %s213
    %p215 = scmp.eq.s32.totalorder %s21, 0
    %p216 = por %p214, %p215
    %p217 = scmp.le.s32.totalorder 1, %s15
    %p218 = scmp.lt.s32.totalorder %s15, 7
    %p219 = pnand %p217, %p218
    %p220 = pneg %p219
    // Predicated region
    $region9: #{seq2seq_forward.2} parent=5 // pred_check
      _
    $region10: #{seq2seq_forward.2} parent=5 // pred_check_branch
      %222 = sbr.rel (%p219) target = $region12
    $region11: #{seq2seq_forward.2} parent=5 // pred_region
      %s223 = ssub.s32 %s15, 1
      // Predicated region
      $region13: #{seq2seq_forward.2} parent=11 // pred_check
        %p224 = pneg %p62
      $region14: #{seq2seq_forward.2} parent=11 // pred_check_branch
        %226 = sbr.rel (%p224) target = $region16
      $region15: #{seq2seq_forward.2} parent=11 // pred_region
        _
      $region16: #{seq2seq_forward.2} parent=11 // pred_fallthru
        _
      // Predicated region
      $region17: #{seq2seq_forward.2} parent=11 // pred_check
        %p227 = pneg %p83
      $region18: #{seq2seq_forward.2} parent=11 // pred_check_branch
        %229 = sbr.rel (%p227) target = $region20
      $region19: #{seq2seq_forward.2} parent=11 // pred_region
        _
      $region20: #{seq2seq_forward.2} parent=11 // pred_fallthru
        _
      // Predicated region
      $region21: #{seq2seq_forward.2} parent=11 // pred_check
        %p230 = pneg %p104
      $region22: #{seq2seq_forward.2} parent=11 // pred_check_branch
        %232 = sbr.rel (%p230) target = $region24
      $region23: #{seq2seq_forward.2} parent=11 // pred_region
        _
      $region24: #{seq2seq_forward.2} parent=11 // pred_fallthru
        _
      // Predicated region
      $region25: #{seq2seq_forward.2} parent=11 // pred_check
        %p233 = pneg %p125
      $region26: #{seq2seq_forward.2} parent=11 // pred_check_branch
        %235 = sbr.rel (%p233) target = $region28
      $region27: #{seq2seq_forward.2} parent=11 // pred_region
        _
      $region28: #{seq2seq_forward.2} parent=11 // pred_fallthru
        _
      // Predicated region
      $region29: #{seq2seq_forward.2} parent=11 // pred_check
        %p236 = pneg %p146
      $region30: #{seq2seq_forward.2} parent=11 // pred_check_branch
        %238 = sbr.rel (%p236) target = $region32
      $region31: #{seq2seq_forward.2} parent=11 // pred_region
        _
      $region32: #{seq2seq_forward.2} parent=11 // pred_fallthru
        _
      // Predicated region
      $region33: #{seq2seq_forward.2} parent=11 // pred_check
        %p239 = pneg %p167
      $region34: #{seq2seq_forward.2} parent=11 // pred_check_branch
        %241 = sbr.rel (%p239) target = $region36
      $region35: #{seq2seq_forward.2} parent=11 // pred_region
        _
      $region36: #{seq2seq_forward.2} parent=11 // pred_fallthru
        _
    $region12: #{seq2seq_forward.2} parent=5 // pred_fallthru
      _
    %p242 = scmp.lt.s32.totalorder %s15, 6
    // Predicated region
    $region37: #{seq2seq_forward.2} parent=5 // pred_check
      %p243 = pneg %p242
    $region38: #{seq2seq_forward.2} parent=5 // pred_check_branch
      %245 = sbr.rel (%p243) target = $region40
    $region39: #{seq2seq_forward.2} parent=5 // pred_region
      // Predicated region
      $region41: #{seq2seq_forward.2} parent=39 // pred_check
        %p246 = pneg %p35
      $region42: #{seq2seq_forward.2} parent=39 // pred_check_branch
        %248 = sbr.rel (%p246) target = $region44
      $region43: #{seq2seq_forward.2} parent=39 // pred_region
        %p249 = scmp.lt.s32.totalorder %s15, 5
        %s250 = scalar_select %p249, %s15, 5
        %s251 = smul.addr %s250, 8
        %s252 = scalar_lea.vmem %s0, %s251
      $region44: #{seq2seq_forward.2} parent=39 // pred_fallthru
        _
    $region40: #{seq2seq_forward.2} parent=5 // pred_fallthru
      _
    %p253 = scmp.le.s32.totalorder 1, %s15
    %p254 = scmp.lt.s32.totalorder %s15, 7
    %p255 = pnand %p253, %p254
    %p256 = pneg %p255
    // Predicated region
    $region45: #{seq2seq_forward.2} parent=5 // pred_check
      _
    $region46: #{seq2seq_forward.2} parent=5 // pred_check_branch
      %258 = sbr.rel (%p255) target = $region48
    $region47: #{seq2seq_forward.2} parent=5 // pred_region
      %s259 = ssub.s32 %s15, 1
      %p260 = scmp.lt.s32.totalorder %s20, 5
      %s261 = scalar_select %p260, %s20, 5
      %s262 = smul.addr %s261, 8
      %s263 = scalar_lea.vmem %s0, %s262
      %p264 = pneg %p41
      %p265 = pneg %p38
      %p266 = pneg %p62
      %p267 = pneg %p59
      %p268 = pneg %p83
      %p269 = pneg %p80
      %p270 = pneg %p104
      %p271 = pneg %p101
      %p272 = pneg %p125
      %p273 = pneg %p122
      %p274 = pneg %p146
      %p275 = pneg %p143
      %p276 = pneg %p167
      %p277 = pneg %p164
      %p278 = pneg %p188
      %p279 = pneg %p185
      %p280 = pneg %p209
      %p281 = pneg %p206
      %p282 = scmp.lt.s32.totalorder %s20, 5
      %s283 = scalar_select %p282, %s20, 5
      %s284 = smul.addr %s283, 8
      %s285 = scalar_lea.vmem %s0, %s284
      %p286 = scmp.eq.s32.totalorder %s20, 0
      // Predicated region
      $region49: #{seq2seq_forward.2} parent=47 // pred_check
        %p287 = pneg %p286
      $region50: #{seq2seq_forward.2} parent=47 // pred_check_branch
        %289 = sbr.rel (%p287) target = $region52
      $region51: #{seq2seq_forward.2} parent=47 // pred_region
        %vm290 = vcmask 261120
        %291 = vst.msk [vmem:[%s7] sm:$0xff] %vm290, 0.0
        %292 = vst.msk [vmem:[%s7 + $0x8] sm:$0xff] %vm290, 0.0
        %293 = vst.msk [vmem:[%s8] sm:$0xff] %vm290, 0.0
        %294 = vst.msk [vmem:[%s8 + $0x8] sm:$0xff] %vm290, 0.0
      $region52: #{seq2seq_forward.2} parent=47 // pred_fallthru
        _
      %v295 = vld [vmem:[%s285] sm:$0xff]
      %v296 = vld [vmem:[%s7] sm:$0xff]
      %v297 = vld [vmem:[%s8] sm:$0xff]
      %v298 = vld [vmem:[%s1] sm:$0xff]
      %v299 = vld [vmem:[%s1 + $0x8] sm:$0xff]
      %v300 = vld [vmem:[%s3] sm:$0xff]
      %v301 = vld [vmem:[%s3 + $0x8] sm:$0xff]
      %v302 = vld [vmem:[%s3 + $0x10] sm:$0xff]
      %v303 = vld [vmem:[%s3 + $0x18] sm:$0xff]
      %vm304 = vcmask 261120
      %v306 = vsel %vm304, %v296, 0
      %308 = vmatprep.subr.mxu0 0.0
      %309 = vmatpush1.msra.mxu0 %v300
      %310 = vmatprep.subr.mxu0 0.0
      %311 = vmatpush1.msra.mxu0 %v301
      %312 = vmatprep.subr.mxu0 0.0
      %313 = vmatpush1.msra.mxu0 %v302
      %314 = vmatprep.subr.mxu0 0.0
      %315 = vmatpush1.msra.mxu0 %v303
      %316 = vmatprep.subr.mxu0 0.0
      %317 = vmatpush1.msra.mxu0 0.0
      %318 = vmatprep.subr.mxu0 0.0
      %319 = vmatpush1.msra.mxu0 0.0
      %320 = vmatprep.subr.mxu0 0.0
      %321 = vmatpush1.msra.mxu0 0.0
      %322 = vmatprep.subr.mxu0 0.0
      %323 = vmatpush1.msra.mxu0 0.0
      %324 = vmatprep.subr.mxu0 0.0
      %325 = vmatpush1.msra.mxu0 0.0
      %326 = vmatprep.subr.mxu0 0.0
      %327 = vmatpush1.msra.mxu0 0.0
      %328 = vmatprep.subr.mxu0 0.0
      %329 = vmatpush1.msra.mxu0 0.0
      %330 = vmatprep.subr.mxu0 0.0
      %331 = vmatpush1.msra.mxu0 0.0
      %332 = vmatprep.subr.mxu0 0.0
      %333 = vmatpush1.msra.mxu0 0.0
      %334 = vmatprep.subr.mxu0 0.0
      %335 = vmatpush1.msra.mxu0 0.0
      %336 = vmatprep.subr.mxu0 0.0
      %337 = vmatpush1.msra.mxu0 0.0
      %338 = vmatprep.subr.mxu0 0.0
      %339 = vmatpush1.msra.mxu0 0.0
      %340 = vmatprep.subr.mxu0 0.0
      %341 = vmatpush1.msra.mxu0 0.0
      %342 = vmatprep.subr.mxu0 0.0
      %343 = vmatpush1.msra.mxu0 0.0
      %344 = vmatprep.subr.mxu0 0.0
      %345 = vmatpush1.msra.mxu0 0.0
      %346 = vmatprep.subr.mxu0 0.0
      %347 = vmatpush1.msra.mxu0 0.0
      %348 = vmatprep.subr.mxu0 0.0
      %349 = vmatpush1.msra.mxu0 0.0
      %350 = vmatprep.subr.mxu0 0.0
      %351 = vmatpush1.msra.mxu0 0.0
      %352 = vmatprep.subr.mxu0 0.0
      %353 = vmatpush1.msra.mxu0 0.0
      %354 = vmatprep.subr.mxu0 0.0
      %355 = vmatpush1.msra.mxu0 0.0
      %356 = vmatprep.subr.mxu0 0.0
      %357 = vmatpush1.msra.mxu0 0.0
      %358 = vmatprep.subr.mxu0 0.0
      %359 = vmatpush1.msra.mxu0 0.0
      %360 = vmatprep.subr.mxu0 0.0
      %361 = vmatpush1.msra.mxu0 0.0
      %362 = vmatprep.subr.mxu0 0.0
      %363 = vmatpush1.msra.mxu0 0.0
      %364 = vmatprep.subr.mxu0 0.0
      %365 = vmatpush1.msra.mxu0 0.0
      %366 = vmatprep.subr.mxu0 0.0
      %367 = vmatpush1.msra.mxu0 0.0
      %368 = vmatprep.subr.mxu0 0.0
      %369 = vmatpush1.msra.mxu0 0.0
      %370 = vmatprep.subr.mxu0 0.0
      %371 = vmatpush1.msra.mxu0 0.0
      %372 = vmatprep.mubr.f32.mxu0 0.0
      %373 = vmatmul.mubr.f32.gmra.mrb[0].mxu0 %v306
      %v374 = vpop.f32.mrb[0].mxu0
      %v375 = vadd.f32 0.0, %v374
      %v376 = vpop.f32.mrb[0].mxu0
      %377 = vdwg.mxu0
      %vm378 = vcmask 130048
      %v380 = vsel %vm378, %v295, 0
      %382 = vmatprep.subr.mxu0 0.0
      %383 = vmatpush1.msra.mxu0 %v298
      %384 = vmatprep.subr.mxu0 0.0
      %385 = vmatpush1.msra.mxu0 %v299
      %386 = vmatprep.subr.mxu0 0.0
      %387 = vmatpush1.msra.mxu0 0.0
      %388 = vmatprep.subr.mxu0 0.0
      %389 = vmatpush1.msra.mxu0 0.0
      %390 = vmatprep.subr.mxu0 0.0
      %391 = vmatpush1.msra.mxu0 0.0
      %392 = vmatprep.subr.mxu0 0.0
      %393 = vmatpush1.msra.mxu0 0.0
      %394 = vmatprep.subr.mxu0 0.0
      %395 = vmatpush1.msra.mxu0 0.0
      %396 = vmatprep.subr.mxu0 0.0
      %397 = vmatpush1.msra.mxu0 0.0
      %398 = vmatprep.subr.mxu0 0.0
      %399 = vmatpush1.msra.mxu0 0.0
      %400 = vmatprep.subr.mxu0 0.0
      %401 = vmatpush1.msra.mxu0 0.0
      %402 = vmatprep.subr.mxu0 0.0
      %403 = vmatpush1.msra.mxu0 0.0
      %404 = vmatprep.subr.mxu0 0.0
      %405 = vmatpush1.msra.mxu0 0.0
      %406 = vmatprep.subr.mxu0 0.0
      %407 = vmatpush1.msra.mxu0 0.0
      %408 = vmatprep.subr.mxu0 0.0
      %409 = vmatpush1.msra.mxu0 0.0
      %410 = vmatprep.subr.mxu0 0.0
      %411 = vmatpush1.msra.mxu0 0.0
      %412 = vmatprep.subr.mxu0 0.0
      %413 = vmatpush1.msra.mxu0 0.0
      %414 = vmatprep.subr.mxu0 0.0
      %415 = vmatpush1.msra.mxu0 0.0
      %416 = vmatprep.subr.mxu0 0.0
      %417 = vmatpush1.msra.mxu0 0.0
      %418 = vmatprep.subr.mxu0 0.0
      %419 = vmatpush1.msra.mxu0 0.0
      %420 = vmatprep.subr.mxu0 0.0
      %421 = vmatpush1.msra.mxu0 0.0
      %422 = vmatprep.subr.mxu0 0.0
      %423 = vmatpush1.msra.mxu0 0.0
      %424 = vmatprep.subr.mxu0 0.0
      %425 = vmatpush1.msra.mxu0 0.0
      %426 = vmatprep.subr.mxu0 0.0
      %427 = vmatpush1.msra.mxu0 0.0
      %428 = vmatprep.subr.mxu0 0.0
      %429 = vmatpush1.msra.mxu0 0.0
      %430 = vmatprep.subr.mxu0 0.0
      %431 = vmatpush1.msra.mxu0 0.0
      %432 = vmatprep.subr.mxu0 0.0
      %433 = vmatpush1.msra.mxu0 0.0
      %434 = vmatprep.subr.mxu0 0.0
      %435 = vmatpush1.msra.mxu0 0.0
      %436 = vmatprep.subr.mxu0 0.0
      %437 = vmatpush1.msra.mxu0 0.0
      %438 = vmatprep.subr.mxu0 0.0
      %439 = vmatpush1.msra.mxu0 0.0
      %440 = vmatprep.subr.mxu0 0.0
      %441 = vmatpush1.msra.mxu0 0.0
      %442 = vmatprep.subr.mxu0 0.0
      %443 = vmatpush1.msra.mxu0 0.0
      %444 = vmatprep.subr.mxu0 0.0
      %445 = vmatpush1.msra.mxu0 0.0
      %446 = vmatprep.mubr.f32.mxu0 0.0
      %447 = vmatmul.mubr.f32.gmra.mrb[0].mxu0 %v380
      %v448 = vpop.f32.mrb[0].mxu0
      %v449 = vadd.f32 %v375, %v448
      %v450 = vpop.f32.mrb[0].mxu0
      %451 = vdwg.mxu0
      %v452 = vld [vmem:[%s5] sm:$0x1]
      %v454 = vlaneseq
      %v455 = vshrl.u32 %v454, 7
      %v456 = vsub.s32 0, %v455
      %v457 = vrot.slane %v452, %v456
      %v459 = vadd.f32 %v449, %v457
      %v460 = vxor.u32 %v459, 2147483648
      %v461 = vmul.f32 %v460, 1.442695
      %v462 = vpow.pop %v461
      %v463 = vadd.f32 %v462, 1.0
      %v464 = vrcp.pop %v463
      %v465 = vmul.f32 1.0, %v464
      %v466 = vtanh.pop %v459
      %468 = vrot.lane.b32.xlu0 %v297, 32
      %v469 = vpop.permute.xlu0 %468
      %v471 = vmul.f32 %v465, %v469
      %473 = vrot.lane.b32.xlu0 %v466, 64
      %v474 = vpop.permute.xlu0 %473
      %v476 = vmul.f32 %v465, %v474
      %478 = vrot.lane.b32.xlu0 %v476, 32
      %v479 = vpop.permute.xlu0 %478
      %v481 = vadd.f32 %v471, %v479
      %v482 = vtanh.pop %v481
      %484 = vrot.lane.b32.xlu0 %v482, 64
      %v485 = vpop.permute.xlu0 %484
      %v487 = vmul.f32 %v465, %v485
      %489 = vrot.lane.b32.xlu0 %v487, 32
      %v490 = vpop.permute.xlu0 %489
      %492 = vst.msk [vmem:[%s7] sm:$0xff] %vm304, %v490
      %494 = vrot.lane.b32.xlu0 %v481, 96
      %v495 = vpop.permute.xlu0 %494
      %497 = vst.msk [vmem:[%s8] sm:$0xff] %vm304, %v495
      %s498 = scalar_lea.vmem %s7, 8
      %v499 = vld [vmem:[%s498] sm:$0xff]
      %s500 = scalar_lea.vmem %s8, 8
      %v501 = vld [vmem:[%s500] sm:$0xff]
      %v502 = vld [vmem:[%s2] sm:$0xff]
      %v503 = vld [vmem:[%s2 + $0x8] sm:$0xff]
      %v504 = vld [vmem:[%s2 + $0x10] sm:$0xff]
      %v505 = vld [vmem:[%s2 + $0x18] sm:$0xff]
      %v506 = vld [vmem:[%s4] sm:$0xff]
      %v507 = vld [vmem:[%s4 + $0x8] sm:$0xff]
      %v508 = vld [vmem:[%s4 + $0x10] sm:$0xff]
      %v509 = vld [vmem:[%s4 + $0x18] sm:$0xff]
      %v511 = vsel %vm304, %v499, 0
      %513 = vmatprep.subr.mxu0 0.0
      %514 = vmatpush1.msra.mxu0 %v506
      %515 = vmatprep.subr.mxu0 0.0
      %516 = vmatpush1.msra.mxu0 %v507
      %517 = vmatprep.subr.mxu0 0.0
      %518 = vmatpush1.msra.mxu0 %v508
      %519 = vmatprep.subr.mxu0 0.0
      %520 = vmatpush1.msra.mxu0 %v509
      %521 = vmatprep.subr.mxu0 0.0
      %522 = vmatpush1.msra.mxu0 0.0
      %523 = vmatprep.subr.mxu0 0.0
      %524 = vmatpush1.msra.mxu0 0.0
      %525 = vmatprep.subr.mxu0 0.0
      %526 = vmatpush1.msra.mxu0 0.0
      %527 = vmatprep.subr.mxu0 0.0
      %528 = vmatpush1.msra.mxu0 0.0
      %529 = vmatprep.subr.mxu0 0.0
      %530 = vmatpush1.msra.mxu0 0.0
      %531 = vmatprep.subr.mxu0 0.0
      %532 = vmatpush1.msra.mxu0 0.0
      %533 = vmatprep.subr.mxu0 0.0
      %534 = vmatpush1.msra.mxu0 0.0
      %535 = vmatprep.subr.mxu0 0.0
      %536 = vmatpush1.msra.mxu0 0.0
      %537 = vmatprep.subr.mxu0 0.0
      %538 = vmatpush1.msra.mxu0 0.0
      %539 = vmatprep.subr.mxu0 0.0
      %540 = vmatpush1.msra.mxu0 0.0
      %541 = vmatprep.subr.mxu0 0.0
      %542 = vmatpush1.msra.mxu0 0.0
      %543 = vmatprep.subr.mxu0 0.0
      %544 = vmatpush1.msra.mxu0 0.0
      %545 = vmatprep.subr.mxu0 0.0
      %546 = vmatpush1.msra.mxu0 0.0
      %547 = vmatprep.subr.mxu0 0.0
      %548 = vmatpush1.msra.mxu0 0.0
      %549 = vmatprep.subr.mxu0 0.0
      %550 = vmatpush1.msra.mxu0 0.0
      %551 = vmatprep.subr.mxu0 0.0
      %552 = vmatpush1.msra.mxu0 0.0
      %553 = vmatprep.subr.mxu0 0.0
      %554 = vmatpush1.msra.mxu0 0.0
      %555 = vmatprep.subr.mxu0 0.0
      %556 = vmatpush1.msra.mxu0 0.0
      %557 = vmatprep.subr.mxu0 0.0
      %558 = vmatpush1.msra.mxu0 0.0
      %559 = vmatprep.subr.mxu0 0.0
      %560 = vmatpush1.msra.mxu0 0.0
      %561 = vmatprep.subr.mxu0 0.0
      %562 = vmatpush1.msra.mxu0 0.0
      %563 = vmatprep.subr.mxu0 0.0
      %564 = vmatpush1.msra.mxu0 0.0
      %565 = vmatprep.subr.mxu0 0.0
      %566 = vmatpush1.msra.mxu0 0.0
      %567 = vmatprep.subr.mxu0 0.0
      %568 = vmatpush1.msra.mxu0 0.0
      %569 = vmatprep.subr.mxu0 0.0
      %570 = vmatpush1.msra.mxu0 0.0
      %571 = vmatprep.subr.mxu0 0.0
      %572 = vmatpush1.msra.mxu0 0.0
      %573 = vmatprep.subr.mxu0 0.0
      %574 = vmatpush1.msra.mxu0 0.0
      %575 = vmatprep.subr.mxu0 0.0
      %576 = vmatpush1.msra.mxu0 0.0
      %577 = vmatprep.mubr.f32.mxu0 0.0
      %578 = vmatmul.mubr.f32.gmra.mrb[0].mxu0 %v511
      %v579 = vpop.f32.mrb[0].mxu0
      %v580 = vadd.f32 0.0, %v579
      %v581 = vpop.f32.mrb[0].mxu0
      %582 = vdwg.mxu0
      %v583 = vsel %vm304, %v490, 0
      %585 = vmatprep.subr.mxu0 0.0
      %586 = vmatpush1.msra.mxu0 %v502
      %587 = vmatprep.subr.mxu0 0.0
      %588 = vmatpush1.msra.mxu0 %v503
      %589 = vmatprep.subr.mxu0 0.0
      %590 = vmatpush1.msra.mxu0 %v504
      %591 = vmatprep.subr.mxu0 0.0
      %592 = vmatpush1.msra.mxu0 %v505
      %593 = vmatprep.subr.mxu0 0.0
      %594 = vmatpush1.msra.mxu0 0.0
      %595 = vmatprep.subr.mxu0 0.0
      %596 = vmatpush1.msra.mxu0 0.0
      %597 = vmatprep.subr.mxu0 0.0
      %598 = vmatpush1.msra.mxu0 0.0
      %599 = vmatprep.subr.mxu0 0.0
      %600 = vmatpush1.msra.mxu0 0.0
      %601 = vmatprep.subr.mxu0 0.0
      %602 = vmatpush1.msra.mxu0 0.0
      %603 = vmatprep.subr.mxu0 0.0
      %604 = vmatpush1.msra.mxu0 0.0
      %605 = vmatprep.subr.mxu0 0.0
      %606 = vmatpush1.msra.mxu0 0.0
      %607 = vmatprep.subr.mxu0 0.0
      %608 = vmatpush1.msra.mxu0 0.0
      %609 = vmatprep.subr.mxu0 0.0
      %610 = vmatpush1.msra.mxu0 0.0
      %611 = vmatprep.subr.mxu0 0.0
      %612 = vmatpush1.msra.mxu0 0.0
      %613 = vmatprep.subr.mxu0 0.0
      %614 = vmatpush1.msra.mxu0 0.0
      %615 = vmatprep.subr.mxu0 0.0
      %616 = vmatpush1.msra.mxu0 0.0
      %617 = vmatprep.subr.mxu0 0.0
      %618 = vmatpush1.msra.mxu0 0.0
      %619 = vmatprep.subr.mxu0 0.0
      %620 = vmatpush1.msra.mxu0 0.0
      %621 = vmatprep.subr.mxu0 0.0
      %622 = vmatpush1.msra.mxu0 0.0
      %623 = vmatprep.subr.mxu0 0.0
      %624 = vmatpush1.msra.mxu0 0.0
      %625 = vmatprep.subr.mxu0 0.0
      %626 = vmatpush1.msra.mxu0 0.0
      %627 = vmatprep.subr.mxu0 0.0
      %628 = vmatpush1.msra.mxu0 0.0
      %629 = vmatprep.subr.mxu0 0.0
      %630 = vmatpush1.msra.mxu0 0.0
      %631 = vmatprep.subr.mxu0 0.0
      %632 = vmatpush1.msra.mxu0 0.0
      %633 = vmatprep.subr.mxu0 0.0
      %634 = vmatpush1.msra.mxu0 0.0
      %635 = vmatprep.subr.mxu0 0.0
      %636 = vmatpush1.msra.mxu0 0.0
      %637 = vmatprep.subr.mxu0 0.0
      %638 = vmatpush1.msra.mxu0 0.0
      %639 = vmatprep.subr.mxu0 0.0
      %640 = vmatpush1.msra.mxu0 0.0
      %641 = vmatprep.subr.mxu0 0.0
      %642 = vmatpush1.msra.mxu0 0.0
      %643 = vmatprep.subr.mxu0 0.0
      %644 = vmatpush1.msra.mxu0 0.0
      %645 = vmatprep.subr.mxu0 0.0
      %646 = vmatpush1.msra.mxu0 0.0
      %647 = vmatprep.subr.mxu0 0.0
      %648 = vmatpush1.msra.mxu0 0.0
      %649 = vmatprep.mubr.f32.mxu0 0.0
      %650 = vmatmul.mubr.f32.gmra.mrb[0].mxu0 %v583
      %v651 = vpop.f32.mrb[0].mxu0
      %v652 = vadd.f32 %v580, %v651
      %v653 = vpop.f32.mrb[0].mxu0
      %654 = vdwg.mxu0
      %v655 = vld [vmem:[%s6] sm:$0x1]
      %v657 = vlaneseq
      %v658 = vshrl.u32 %v657, 7
      %v659 = vsub.s32 0, %v658
      %v660 = vrot.slane %v655, %v659
      %v662 = vadd.f32 %v652, %v660
      %v663 = vxor.u32 %v662, 2147483648
      %v664 = vmul.f32 %v663, 1.442695
      %v665 = vpow.pop %v664
      %v666 = vadd.f32 %v665, 1.0
      %v667 = vrcp.pop %v666
      %v668 = vmul.f32 1.0, %v667
      %v669 = vtanh.pop %v662
      %671 = vrot.lane.b32.xlu0 %v501, 32
      %v672 = vpop.permute.xlu0 %671
      %v674 = vmul.f32 %v668, %v672
      %676 = vrot.lane.b32.xlu0 %v669, 64
      %v677 = vpop.permute.xlu0 %676
      %v679 = vmul.f32 %v668, %v677
      %681 = vrot.lane.b32.xlu0 %v679, 32
      %v682 = vpop.permute.xlu0 %681
      %v684 = vadd.f32 %v674, %v682
      %v685 = vtanh.pop %v684
      %687 = vrot.lane.b32.xlu0 %v685, 64
      %v688 = vpop.permute.xlu0 %687
      %v690 = vmul.f32 %v668, %v688
      %692 = vrot.lane.b32.xlu0 %v690, 32
      %v693 = vpop.permute.xlu0 %692
      %695 = vst.msk [vmem:[%s498] sm:$0xff] %vm304, %v693
      %697 = vrot.lane.b32.xlu0 %v684, 96
      %v698 = vpop.permute.xlu0 %697
      %700 = vst.msk [vmem:[%s500] sm:$0xff] %vm304, %v698
      // Predicated region
      $region53: #{seq2seq_forward.2} parent=47 // pred_check
        %p701 = pneg %p185
      $region54: #{seq2seq_forward.2} parent=47 // pred_check_branch
        %703 = sbr.rel (%p701) target = $region56
      $region55: #{seq2seq_forward.2} parent=47 // pred_region
        _
      $region56: #{seq2seq_forward.2} parent=47 // pred_fallthru
        _
      // Predicated region
      $region57: #{seq2seq_forward.2} parent=47 // pred_check
        %p704 = pneg %p206
      $region58: #{seq2seq_forward.2} parent=47 // pred_check_branch
        %706 = sbr.rel (%p704) target = $region60
      $region59: #{seq2seq_forward.2} parent=47 // pred_region
        _
      $region60: #{seq2seq_forward.2} parent=47 // pred_fallthru
        _
      // Predicated region
      $region61: #{seq2seq_forward.2} parent=47 // pred_check
        %p707 = pneg %p185
      $region62: #{seq2seq_forward.2} parent=47 // pred_check_branch
        %709 = sbr.rel (%p707) target = $region64
      $region63: #{seq2seq_forward.2} parent=47 // pred_region
        _
      $region64: #{seq2seq_forward.2} parent=47 // pred_fallthru
        _
      // Predicated region
      $region65: #{seq2seq_forward.2} parent=47 // pred_check
        %p710 = pneg %p206
      $region66: #{seq2seq_forward.2} parent=47 // pred_check_branch
        %712 = sbr.rel (%p710) target = $region68
      $region67: #{seq2seq_forward.2} parent=47 // pred_region
        _
      $region68: #{seq2seq_forward.2} parent=47 // pred_fallthru
        _
    $region48: #{seq2seq_forward.2} parent=5 // pred_fallthru
      _
    %p713 = scmp.le.s32.totalorder 2, %s15
    // Predicated region
    $region69: #{seq2seq_forward.2} parent=5 // pred_check
      %p714 = pneg %p713
    $region70: #{seq2seq_forward.2} parent=5 // pred_check_branch
      %716 = sbr.rel (%p714) target = $region72
    $region71: #{seq2seq_forward.2} parent=5 // pred_region
      %s717 = ssub.s32 %s15, 2
    $region72: #{seq2seq_forward.2} parent=5 // pred_fallthru
      _
  $region6: #{seq2seq_forward.2} parent=0 // loop_footer
    %s19 = sadd.s32 1, %s15
  $region7: #{seq2seq_forward.2} parent=0 // loop_footer_branch
    %14 = sbr.rel target = $region3
  $region8: #{seq2seq_forward.2} parent=0 // loop_exit
    _

// kernel: seq2seq_forward.3
$region0: #{seq2seq_forward.3}
  #allocation0 [shape = 'u32[]', space=smem, size = 0x4, offset = 0x4, fixed_abs, tag = 'smem constant byte address 0x4 - core index']
  #allocation1 [shape = 'u32[144,128]{1,0:T(1,128)}', space=vmem, size = 0x12000, scoped, tag = 'internal scratch']
  #allocation2 [shape = 'f32[2,8,32]{2,1,0:T(8,128)}', space=vmem, size = 0x2000, scoped, tag = 'scratch operand']
  #allocation3 [shape = 'f32[2,8,32]{2,1,0:T(8,128)}', space=vmem, size = 0x2000, scoped, tag = 'scratch operand']
  #allocation4 [shape = 'f32[8,32]{1,0:T(8,128)}', space=vmem, size = 0x1000, scoped, tag = 'scratch operand']
  #allocation5 [shape = 's32[1]{0}', space=sflag, size = 0x4, scoped, tag = 'scoped memory for seq2seq_forward.3']
  #allocation6 [shape = 'u8[512]{0}', space=smem, size = 0x200, scoped, tag = 'prefetched SMEM operand 0']
  %s0 = inlined_call_operand.vmem [shape: s32[7], index: 0, kind: input, shape index: {}]
  %s1 = inlined_call_operand.vmem [shape: f32[7,8,32], index: 1, kind: input, shape index: {}]
  %s2 = inlined_call_operand.vmem [shape: f32[2,8,32], index: 2, kind: input, shape index: {}]
  %s3 = inlined_call_operand.vmem [shape: f32[2,8,32], index: 3, kind: input, shape index: {}]
  %s4 = inlined_call_operand.vmem [shape: f32[32,128], index: 4, kind: input, shape index: {}]
  %s5 = inlined_call_operand.vmem [shape: f32[32,128], index: 5, kind: input, shape index: {}]
  %s6 = inlined_call_operand.vmem [shape: f32[32,128], index: 6, kind: input, shape index: {}]
  %s7 = inlined_call_operand.vmem [shape: f32[32,128], index: 7, kind: input, shape index: {}]
  %s8 = inlined_call_operand.vmem [shape: f32[1,128], index: 8, kind: input, shape index: {}]
  %s9 = inlined_call_operand.vmem [shape: f32[1,128], index: 9, kind: input, shape index: {}]
  %s10 = inlined_call_operand.vmem [shape: f32[32,32], index: 10, kind: input, shape index: {}]
  %s11 = inlined_call_operand.vmem [shape: f32[1,32], index: 11, kind: input, shape index: {}]
  %s12 = inlined_call_operand.hbm [shape: f32[7,8,32], index: 12, kind: output, shape index: {}]
  %s13 = sld [smem:[#allocation0]]
  $region85: #{seq2seq_forward.3} parent=0
    _
  %s15 = ssub.s32 1, %s13
  %s16 = scalar_select 0, %s15, %s13
  %s17 = sshll.u32 %s0, 4
  %s18 = int_to_ptr.vmem [resolvable:$true] %s17
  %20 = dma.vmem_to_smem %s18, 16, [#allocation6], [#allocation5]
  %21 = dma.done [#allocation5], 16
  %22 = sfence
  $region1: #{seq2seq_forward.3} parent=0
    #allocation7 [shape = 'u8[8192]{0}', space=vmem, size = 0x2000, scoped, tag = 'output window, operand 0']
    #allocation8 [shape = 's32[2]{0}', space=sflag, size = 0x8, scoped, tag = 'scoped memory for seq2seq_forward.3']
    %23 = vsyncpa [#allocation8], 0
    %s24 = scalar_lea.sflag [#allocation8], 1
    %25 = vsyncpa %s24, 0
    loop: start=0, step=1, limit=9
    $region2: #{seq2seq_forward.3} parent=1 // loop_pre_header
      _
    $region3: #{seq2seq_forward.3} parent=1 // loop_header
      %s27 = sphi 0, %s31
      %p28 = scmp.ge.s32.totalorder %s27, 9
      %s37 = sphi 0, %s39
      %s40 = sphi 0, %s37
      %s41 = sphi 0, %s40
      %s57 = sphi 0, %s41
      %s61 = sphi 0, %s61
      %s63 = sphi 0, %s61
      %s64 = sphi 0, %s63
      %s78 = sphi 0, %s64
      %s82 = sphi 0, %s82
      %s84 = sphi 0, %s82
      %s85 = sphi 0, %s84
      %s99 = sphi 0, %s85
      %s103 = sphi 0, %s103
      %s105 = sphi 0, %s103
      %s106 = sphi 0, %s105
      %s120 = sphi 0, %s106
      %s124 = sphi 0, %s124
      %s126 = sphi 0, %s124
      %s127 = sphi 0, %s126
      %s141 = sphi 0, %s127
      %s145 = sphi 0, %s145
      %s147 = sphi 0, %s145
      %s148 = sphi 0, %s147
      %s162 = sphi 0, %s148
      %s166 = sphi 0, %s166
      %s168 = sphi 0, %s166
      %s169 = sphi 0, %s168
      %s183 = sphi 0, %s169
      %s187 = sphi 0, %s187
      %s189 = sphi 0, %s187
      %s190 = sphi 0, %s189
      %s204 = sphi 0, %s190
      %s208 = sphi 0, %s208
      %s210 = sphi 0, %s208
      %s211 = sphi 0, %s210
      %s225 = sphi 0, %s211
      %s229 = sphi 0, %s229
      %s231 = sphi 0, %s229
      %s232 = sphi 0, %s231
      %s246 = sphi 0, %s232
      %s250 = sphi 0, %s250
      %s252 = sphi 0, %s250
      %s253 = sphi 0, %s252
      %s267 = sphi 0, %s253
      %s273 = sphi 0, %s275
      %s276 = sphi 0, %s273
      %s277 = sphi 0, %s276
      %s293 = sphi 0, %s277
    $region4: #{seq2seq_forward.3} parent=1 // loop_header_branch
      %30 = sbr.rel (%p28) target = $region8
    $region5: #{seq2seq_forward.3} parent=1 // loop_body
      %s32 = ssub.s32 %s27, 1
      %s33 = ssub.s32 %s27, 2
      %s34 = sadd.s32 %s27, 1
      %s35 = ssub.s32 %s27, %s34
      %p36 = scmp.eq.s32.totalorder %s35, 0
      %s38 = sadd.s32 %s37, 1
      %s39 = scalar_select %p36, %s37, %s38
      %p42 = pneg %p36
      %p43 = scmp.eq.s32.totalorder %s27, 6
      %p44 = por %p42, %p43
      %p45 = scmp.ne.s32.totalorder %s37, %s40
      %p46 = scmp.eq.s32.totalorder %s27, 0
      %p47 = por %p45, %p46
      %p48 = scmp.ne.s32.totalorder %s37, %s40
      %p49 = scmp.eq.s32.totalorder %s32, 6
      %p50 = por %p48, %p49
      %p51 = scmp.ne.s32.totalorder %s40, %s41
      %p52 = scmp.eq.s32.totalorder %s32, 0
      %p53 = por %p51, %p52
      %p54 = scmp.ne.s32.totalorder %s40, %s41
      %p55 = scmp.eq.s32.totalorder %s33, 6
      %p56 = por %p54, %p55
      %p58 = scmp.ne.s32.totalorder %s41, %s57
      %p59 = scmp.eq.s32.totalorder %s33, 0
      %p60 = por %p58, %p59
      %s62 = sadd.s32 %s61, 1
      %p65 = scmp.eq.s32.totalorder %s27, 6
      %p66 = scmp.ne.s32.totalorder %s61, %s63
      %p67 = scmp.eq.s32.totalorder %s27, 0
      %p68 = por %p66, %p67
      %p69 = scmp.ne.s32.totalorder %s61, %s63
      %p70 = scmp.eq.s32.totalorder %s32, 6
      %p71 = por %p69, %p70
      %p72 = scmp.ne.s32.totalorder %s63, %s64
      %p73 = scmp.eq.s32.totalorder %s32, 0
      %p74 = por %p72, %p73
      %p75 = scmp.ne.s32.totalorder %s63, %s64
      %p76 = scmp.eq.s32.totalorder %s33, 6
      %p77 = por %p75, %p76
      %p79 = scmp.ne.s32.totalorder %s64, %s78
      %p80 = scmp.eq.s32.totalorder %s33, 0
      %p81 = por %p79, %p80
      %s83 = sadd.s32 %s82, 1
      %p86 = scmp.eq.s32.totalorder %s27, 6
      %p87 = scmp.ne.s32.totalorder %s82, %s84
      %p88 = scmp.eq.s32.totalorder %s27, 0
      %p89 = por %p87, %p88
      %p90 = scmp.ne.s32.totalorder %s82, %s84
      %p91 = scmp.eq.s32.totalorder %s32, 6
      %p92 = por %p90, %p91
      %p93 = scmp.ne.s32.totalorder %s84, %s85
      %p94 = scmp.eq.s32.totalorder %s32, 0
      %p95 = por %p93, %p94
      %p96 = scmp.ne.s32.totalorder %s84, %s85
      %p97 = scmp.eq.s32.totalorder %s33, 6
      %p98 = por %p96, %p97
      %p100 = scmp.ne.s32.totalorder %s85, %s99
      %p101 = scmp.eq.s32.totalorder %s33, 0
      %p102 = por %p100, %p101
      %s104 = sadd.s32 %s103, 1
      %p107 = scmp.eq.s32.totalorder %s27, 6
      %p108 = scmp.ne.s32.totalorder %s103, %s105
      %p109 = scmp.eq.s32.totalorder %s27, 0
      %p110 = por %p108, %p109
      %p111 = scmp.ne.s32.totalorder %s103, %s105
      %p112 = scmp.eq.s32.totalorder %s32, 6
      %p113 = por %p111, %p112
      %p114 = scmp.ne.s32.totalorder %s105, %s106
      %p115 = scmp.eq.s32.totalorder %s32, 0
      %p116 = por %p114, %p115
      %p117 = scmp.ne.s32.totalorder %s105, %s106
      %p118 = scmp.eq.s32.totalorder %s33, 6
      %p119 = por %p117, %p118
      %p121 = scmp.ne.s32.totalorder %s106, %s120
      %p122 = scmp.eq.s32.totalorder %s33, 0
      %p123 = por %p121, %p122
      %s125 = sadd.s32 %s124, 1
      %p128 = scmp.eq.s32.totalorder %s27, 6
      %p129 = scmp.ne.s32.totalorder %s124, %s126
      %p130 = scmp.eq.s32.totalorder %s27, 0
      %p131 = por %p129, %p130
      %p132 = scmp.ne.s32.totalorder %s124, %s126
      %p133 = scmp.eq.s32.totalorder %s32, 6
      %p134 = por %p132, %p133
      %p135 = scmp.ne.s32.totalorder %s126, %s127
      %p136 = scmp.eq.s32.totalorder %s32, 0
      %p137 = por %p135, %p136
      %p138 = scmp.ne.s32.totalorder %s126, %s127
      %p139 = scmp.eq.s32.totalorder %s33, 6
      %p140 = por %p138, %p139
      %p142 = scmp.ne.s32.totalorder %s127, %s141
      %p143 = scmp.eq.s32.totalorder %s33, 0
      %p144 = por %p142, %p143
      %s146 = sadd.s32 %s145, 1
      %p149 = scmp.eq.s32.totalorder %s27, 6
      %p150 = scmp.ne.s32.totalorder %s145, %s147
      %p151 = scmp.eq.s32.totalorder %s27, 0
      %p152 = por %p150, %p151
      %p153 = scmp.ne.s32.totalorder %s145, %s147
      %p154 = scmp.eq.s32.totalorder %s32, 6
      %p155 = por %p153, %p154
      %p156 = scmp.ne.s32.totalorder %s147, %s148
      %p157 = scmp.eq.s32.totalorder %s32, 0
      %p158 = por %p156, %p157
      %p159 = scmp.ne.s32.totalorder %s147, %s148
      %p160 = scmp.eq.s32.totalorder %s33, 6
      %p161 = por %p159, %p160
      %p163 = scmp.ne.s32.totalorder %s148, %s162
      %p164 = scmp.eq.s32.totalorder %s33, 0
      %p165 = por %p163, %p164
      %s167 = sadd.s32 %s166, 1
      %p170 = scmp.eq.s32.totalorder %s27, 6
      %p171 = scmp.ne.s32.totalorder %s166, %s168
      %p172 = scmp.eq.s32.totalorder %s27, 0
      %p173 = por %p171, %p172
      %p174 = scmp.ne.s32.totalorder %s166, %s168
      %p175 = scmp.eq.s32.totalorder %s32, 6
      %p176 = por %p174, %p175
      %p177 = scmp.ne.s32.totalorder %s168, %s169
      %p178 = scmp.eq.s32.totalorder %s32, 0
      %p179 = por %p177, %p178
      %p180 = scmp.ne.s32.totalorder %s168, %s169
      %p181 = scmp.eq.s32.totalorder %s33, 6
      %p182 = por %p180, %p181
      %p184 = scmp.ne.s32.totalorder %s169, %s183
      %p185 = scmp.eq.s32.totalorder %s33, 0
      %p186 = por %p184, %p185
      %s188 = sadd.s32 %s187, 1
      %p191 = scmp.eq.s32.totalorder %s27, 6
      %p192 = scmp.ne.s32.totalorder %s187, %s189
      %p193 = scmp.eq.s32.totalorder %s27, 0
      %p194 = por %p192, %p193
      %p195 = scmp.ne.s32.totalorder %s187, %s189
      %p196 = scmp.eq.s32.totalorder %s32, 6
      %p197 = por %p195, %p196
      %p198 = scmp.ne.s32.totalorder %s189, %s190
      %p199 = scmp.eq.s32.totalorder %s32, 0
      %p200 = por %p198, %p199
      %p201 = scmp.ne.s32.totalorder %s189, %s190
      %p202 = scmp.eq.s32.totalorder %s33, 6
      %p203 = por %p201, %p202
      %p205 = scmp.ne.s32.totalorder %s190, %s204
      %p206 = scmp.eq.s32.totalorder %s33, 0
      %p207 = por %p205, %p206
      %s209 = sadd.s32 %s208, 1
      %p212 = scmp.eq.s32.totalorder %s27, 6
      %p213 = scmp.ne.s32.totalorder %s208, %s210
      %p214 = scmp.eq.s32.totalorder %s27, 0
      %p215 = por %p213, %p214
      %p216 = scmp.ne.s32.totalorder %s208, %s210
      %p217 = scmp.eq.s32.totalorder %s32, 6
      %p218 = por %p216, %p217
      %p219 = scmp.ne.s32.totalorder %s210, %s211
      %p220 = scmp.eq.s32.totalorder %s32, 0
      %p221 = por %p219, %p220
      %p222 = scmp.ne.s32.totalorder %s210, %s211
      %p223 = scmp.eq.s32.totalorder %s33, 6
      %p224 = por %p222, %p223
      %p226 = scmp.ne.s32.totalorder %s211, %s225
      %p227 = scmp.eq.s32.totalorder %s33, 0
      %p228 = por %p226, %p227
      %s230 = sadd.s32 %s229, 1
      %p233 = scmp.eq.s32.totalorder %s27, 6
      %p234 = scmp.ne.s32.totalorder %s229, %s231
      %p235 = scmp.eq.s32.totalorder %s27, 0
      %p236 = por %p234, %p235
      %p237 = scmp.ne.s32.totalorder %s229, %s231
      %p238 = scmp.eq.s32.totalorder %s32, 6
      %p239 = por %p237, %p238
      %p240 = scmp.ne.s32.totalorder %s231, %s232
      %p241 = scmp.eq.s32.totalorder %s32, 0
      %p242 = por %p240, %p241
      %p243 = scmp.ne.s32.totalorder %s231, %s232
      %p244 = scmp.eq.s32.totalorder %s33, 6
      %p245 = por %p243, %p244
      %p247 = scmp.ne.s32.totalorder %s232, %s246
      %p248 = scmp.eq.s32.totalorder %s33, 0
      %p249 = por %p247, %p248
      %s251 = sadd.s32 %s250, 1
      %p254 = scmp.eq.s32.totalorder %s27, 6
      %p255 = scmp.ne.s32.totalorder %s250, %s252
      %p256 = scmp.eq.s32.totalorder %s27, 0
      %p257 = por %p255, %p256
      %p258 = scmp.ne.s32.totalorder %s250, %s252
      %p259 = scmp.eq.s32.totalorder %s32, 6
      %p260 = por %p258, %p259
      %p261 = scmp.ne.s32.totalorder %s252, %s253
      %p262 = scmp.eq.s32.totalorder %s32, 0
      %p263 = por %p261, %p262
      %p264 = scmp.ne.s32.totalorder %s252, %s253
      %p265 = scmp.eq.s32.totalorder %s33, 6
      %p266 = por %p264, %p265
      %p268 = scmp.ne.s32.totalorder %s253, %s267
      %p269 = scmp.eq.s32.totalorder %s33, 0
      %p270 = por %p268, %p269
      %s271 = ssub.s32 %s27, %s34
      %p272 = scmp.eq.s32.totalorder %s271, 0
      %s274 = sadd.s32 %s273, 1
      %s275 = scalar_select %p272, %s273, %s274
      %p278 = pneg %p272
      %p279 = scmp.eq.s32.totalorder %s27, 6
      %p280 = por %p278, %p279
      %p281 = scmp.ne.s32.totalorder %s273, %s276
      %p282 = scmp.eq.s32.totalorder %s27, 0
      %p283 = por %p281, %p282
      %p284 = scmp.ne.s32.totalorder %s273, %s276
      %p285 = scmp.eq.s32.totalorder %s32, 6
      %p286 = por %p284, %p285
      %p287 = scmp.ne.s32.totalorder %s276, %s277
      %p288 = scmp.eq.s32.totalorder %s32, 0
      %p289 = por %p287, %p288
      %p290 = scmp.ne.s32.totalorder %s276, %s277
      %p291 = scmp.eq.s32.totalorder %s33, 6
      %p292 = por %p290, %p291
      %p294 = scmp.ne.s32.totalorder %s277, %s293
      %p295 = scmp.eq.s32.totalorder %s33, 0
      %p296 = por %p294, %p295
      %p297 = scmp.le.s32.totalorder 1, %s27
      %p298 = scmp.lt.s32.totalorder %s27, 8
      %p299 = pnand %p297, %p298
      %p300 = pneg %p299
      // Predicated region
      $region9: #{seq2seq_forward.3} parent=5 // pred_check
        _
      $region10: #{seq2seq_forward.3} parent=5 // pred_check_branch
        %302 = sbr.rel (%p299) target = $region12
      $region11: #{seq2seq_forward.3} parent=5 // pred_region
        %s303 = ssub.s32 %s27, 1
        // Predicated region
        $region13: #{seq2seq_forward.3} parent=11 // pred_check
          %p304 = pneg %p74
        $region14: #{seq2seq_forward.3} parent=11 // pred_check_branch
          %306 = sbr.rel (%p304) target = $region16
        $region15: #{seq2seq_forward.3} parent=11 // pred_region
          _
        $region16: #{seq2seq_forward.3} parent=11 // pred_fallthru
          _
        // Predicated region
        $region17: #{seq2seq_forward.3} parent=11 // pred_check
          %p307 = pneg %p95
        $region18: #{seq2seq_forward.3} parent=11 // pred_check_branch
          %309 = sbr.rel (%p307) target = $region20
        $region19: #{seq2seq_forward.3} parent=11 // pred_region
          _
        $region20: #{seq2seq_forward.3} parent=11 // pred_fallthru
          _
        // Predicated region
        $region21: #{seq2seq_forward.3} parent=11 // pred_check
          %p310 = pneg %p116
        $region22: #{seq2seq_forward.3} parent=11 // pred_check_branch
          %312 = sbr.rel (%p310) target = $region24
        $region23: #{seq2seq_forward.3} parent=11 // pred_region
          _
        $region24: #{seq2seq_forward.3} parent=11 // pred_fallthru
          _
        // Predicated region
        $region25: #{seq2seq_forward.3} parent=11 // pred_check
          %p313 = pneg %p137
        $region26: #{seq2seq_forward.3} parent=11 // pred_check_branch
          %315 = sbr.rel (%p313) target = $region28
        $region27: #{seq2seq_forward.3} parent=11 // pred_region
          _
        $region28: #{seq2seq_forward.3} parent=11 // pred_fallthru
          _
        // Predicated region
        $region29: #{seq2seq_forward.3} parent=11 // pred_check
          %p316 = pneg %p158
        $region30: #{seq2seq_forward.3} parent=11 // pred_check_branch
          %318 = sbr.rel (%p316) target = $region32
        $region31: #{seq2seq_forward.3} parent=11 // pred_region
          _
        $region32: #{seq2seq_forward.3} parent=11 // pred_fallthru
          _
        // Predicated region
        $region33: #{seq2seq_forward.3} parent=11 // pred_check
          %p319 = pneg %p179
        $region34: #{seq2seq_forward.3} parent=11 // pred_check_branch
          %321 = sbr.rel (%p319) target = $region36
        $region35: #{seq2seq_forward.3} parent=11 // pred_region
          _
        $region36: #{seq2seq_forward.3} parent=11 // pred_fallthru
          _
        // Predicated region
        $region37: #{seq2seq_forward.3} parent=11 // pred_check
          %p322 = pneg %p200
        $region38: #{seq2seq_forward.3} parent=11 // pred_check_branch
          %324 = sbr.rel (%p322) target = $region40
        $region39: #{seq2seq_forward.3} parent=11 // pred_region
          _
        $region40: #{seq2seq_forward.3} parent=11 // pred_fallthru
          _
        // Predicated region
        $region41: #{seq2seq_forward.3} parent=11 // pred_check
          %p325 = pneg %p221
        $region42: #{seq2seq_forward.3} parent=11 // pred_check_branch
          %327 = sbr.rel (%p325) target = $region44
        $region43: #{seq2seq_forward.3} parent=11 // pred_region
          _
        $region44: #{seq2seq_forward.3} parent=11 // pred_fallthru
          _
        // Predicated region
        $region45: #{seq2seq_forward.3} parent=11 // pred_check
          %p328 = pneg %p242
        $region46: #{seq2seq_forward.3} parent=11 // pred_check_branch
          %330 = sbr.rel (%p328) target = $region48
        $region47: #{seq2seq_forward.3} parent=11 // pred_region
          _
        $region48: #{seq2seq_forward.3} parent=11 // pred_fallthru
          _
        // Predicated region
        $region49: #{seq2seq_forward.3} parent=11 // pred_check
          %p331 = pneg %p263
        $region50: #{seq2seq_forward.3} parent=11 // pred_check_branch
          %333 = sbr.rel (%p331) target = $region52
        $region51: #{seq2seq_forward.3} parent=11 // pred_region
          _
        $region52: #{seq2seq_forward.3} parent=11 // pred_fallthru
          _
      $region12: #{seq2seq_forward.3} parent=5 // pred_fallthru
        _
      %p334 = scmp.lt.s32.totalorder %s27, 7
      // Predicated region
      $region53: #{seq2seq_forward.3} parent=5 // pred_check
        %p335 = pneg %p334
      $region54: #{seq2seq_forward.3} parent=5 // pred_check_branch
        %337 = sbr.rel (%p335) target = $region56
      $region55: #{seq2seq_forward.3} parent=5 // pred_region
        // Predicated region
        $region57: #{seq2seq_forward.3} parent=55 // pred_check
          %p338 = pneg %p47
        $region58: #{seq2seq_forward.3} parent=55 // pred_check_branch
          %340 = sbr.rel (%p338) target = $region60
        $region59: #{seq2seq_forward.3} parent=55 // pred_region
          %p341 = scmp.lt.s32.totalorder %s27, 6
          %s342 = scalar_select %p341, %s27, 6
          %s343 = smul.addr %s342, 8
          %s344 = scalar_lea.vmem %s1, %s343
        $region60: #{seq2seq_forward.3} parent=55 // pred_fallthru
          _
      $region56: #{seq2seq_forward.3} parent=5 // pred_fallthru
        _
      %p345 = scmp.le.s32.totalorder 1, %s27
      %p346 = scmp.lt.s32.totalorder %s27, 8
      %p347 = pnand %p345, %p346
      %p348 = pneg %p347
      // Predicated region
      $region61: #{seq2seq_forward.3} parent=5 // pred_check
        _
      $region62: #{seq2seq_forward.3} parent=5 // pred_check_branch
        %350 = sbr.rel (%p347) target = $region64
      $region63: #{seq2seq_forward.3} parent=5 // pred_region
        %s351 = ssub.s32 %s27, 1
        %p352 = scmp.lt.s32.totalorder %s32, 6
        %s353 = scalar_select %p352, %s32, 6
        %s354 = smul.addr %s353, 8
        %s355 = scalar_lea.vmem %s1, %s354
        %p356 = pneg %p53
        %p357 = pneg %p50
        %p358 = pneg %p74
        %p359 = pneg %p71
        %p360 = pneg %p95
        %p361 = pneg %p92
        %p362 = pneg %p116
        %p363 = pneg %p113
        %p364 = pneg %p137
        %p365 = pneg %p134
        %p366 = pneg %p158
        %p367 = pneg %p155
        %p368 = pneg %p179
        %p369 = pneg %p176
        %p370 = pneg %p200
        %p371 = pneg %p197
        %p372 = pneg %p221
        %p373 = pneg %p218
        %p374 = pneg %p242
        %p375 = pneg %p239
        %p376 = pneg %p263
        %p377 = pneg %p260
        %p378 = pneg %p289
        %p379 = pneg %p286
        %s380 = sand.u32 %s276, 1
        %s381 = scalar_lea.sflag [#allocation8], %s380
        %s382 = sand.u32 %s276, 1
        %s383 = smul.addr %s382, 8
        %s384 = scalar_lea.vmem [#allocation7], %s383
        %p385 = scmp.lt.s32.totalorder %s32, 6
        %s386 = scalar_select %p385, %s32, 6
        %s387 = smul.addr %s386, 8
        %s388 = scalar_lea.vmem %s1, %s387
        %p389 = scmp.eq.s32.totalorder %s32, 0
        // Predicated region
        $region65: #{seq2seq_forward.3} parent=63 // pred_check
          %p390 = pneg %p389
        $region66: #{seq2seq_forward.3} parent=63 // pred_check_branch
          %392 = sbr.rel (%p390) target = $region68
        $region67: #{seq2seq_forward.3} parent=63 // pred_region
          %v393 = vld [vmem:[%s2] sm:$0xff]
          %v394 = vld [vmem:[%s2 + $0x8] sm:$0xff]
          %vm395 = vcmask 261120
          %396 = vst.msk [vmem:[#allocation2] sm:$0xff] %vm395, %v393
          %397 = vst.msk [vmem:[#allocation2 + $0x8] sm:$0xff] %vm395, %v394
          %v398 = vld [vmem:[%s3] sm:$0xff]
          %v399 = vld [vmem:[%s3 + $0x8] sm:$0xff]
          %400 = vst.msk [vmem:[#allocation3] sm:$0xff] %vm395, %v398
          %401 = vst.msk [vmem:[#allocation3 + $0x8] sm:$0xff] %vm395, %v399
          %v402 = vld [vmem:[%s388] sm:$0xff]
          %403 = vst.msk [vmem:[#allocation4] sm:$0xff] %vm395, %v402
          %404 = vst.msk [vmem:[%s384] sm:$0xff] %vm395, 0.0
        $region68: #{seq2seq_forward.3} parent=63 // pred_fallthru
          _
        %p405 = scmp.gt.s32.totalorder %s32, 0
        // Predicated region
        $region69: #{seq2seq_forward.3} parent=63 // pred_check
          %p406 = pneg %p405
        $region70: #{seq2seq_forward.3} parent=63 // pred_check_branch
          %408 = sbr.rel (%p406) target = $region72
        $region71: #{seq2seq_forward.3} parent=63 // pred_region
          %v409 = vld [vmem:[#allocation4] sm:$0xff]
          %v410 = vld [vmem:[#allocation2] sm:$0xff]
          %v411 = vld [vmem:[#allocation3] sm:$0xff]
          %v412 = vld [vmem:[%s4] sm:$0xff]
          %v413 = vld [vmem:[%s4 + $0x8] sm:$0xff]
          %v414 = vld [vmem:[%s4 + $0x10] sm:$0xff]
          %v415 = vld [vmem:[%s4 + $0x18] sm:$0xff]
          %v416 = vld [vmem:[%s6] sm:$0xff]
          %v417 = vld [vmem:[%s6 + $0x8] sm:$0xff]
          %v418 = vld [vmem:[%s6 + $0x10] sm:$0xff]
          %v419 = vld [vmem:[%s6 + $0x18] sm:$0xff]
          %vm420 = vcmask 261120
          %v422 = vsel %vm420, %v410, 0
          %424 = vmatprep.subr.mxu0 0.0
          %425 = vmatpush1.msra.mxu0 %v416
          %426 = vmatprep.subr.mxu0 0.0
          %427 = vmatpush1.msra.mxu0 %v417
          %428 = vmatprep.subr.mxu0 0.0
          %429 = vmatpush1.msra.mxu0 %v418
          %430 = vmatprep.subr.mxu0 0.0
          %431 = vmatpush1.msra.mxu0 %v419
          %432 = vmatprep.subr.mxu0 0.0
          %433 = vmatpush1.msra.mxu0 0.0
          %434 = vmatprep.subr.mxu0 0.0
          %435 = vmatpush1.msra.mxu0 0.0
          %436 = vmatprep.subr.mxu0 0.0
          %437 = vmatpush1.msra.mxu0 0.0
          %438 = vmatprep.subr.mxu0 0.0
          %439 = vmatpush1.msra.mxu0 0.0
          %440 = vmatprep.subr.mxu0 0.0
          %441 = vmatpush1.msra.mxu0 0.0
          %442 = vmatprep.subr.mxu0 0.0
          %443 = vmatpush1.msra.mxu0 0.0
          %444 = vmatprep.subr.mxu0 0.0
          %445 = vmatpush1.msra.mxu0 0.0
          %446 = vmatprep.subr.mxu0 0.0
          %447 = vmatpush1.msra.mxu0 0.0
          %448 = vmatprep.subr.mxu0 0.0
          %449 = vmatpush1.msra.mxu0 0.0
          %450 = vmatprep.subr.mxu0 0.0
          %451 = vmatpush1.msra.mxu0 0.0
          %452 = vmatprep.subr.mxu0 0.0
          %453 = vmatpush1.msra.mxu0 0.0
          %454 = vmatprep.subr.mxu0 0.0
          %455 = vmatpush1.msra.mxu0 0.0
          %456 = vmatprep.subr.mxu0 0.0
          %457 = vmatpush1.msra.mxu0 0.0
          %458 = vmatprep.subr.mxu0 0.0
          %459 = vmatpush1.msra.mxu0 0.0
          %460 = vmatprep.subr.mxu0 0.0
          %461 = vmatpush1.msra.mxu0 0.0
          %462 = vmatprep.subr.mxu0 0.0
          %463 = vmatpush1.msra.mxu0 0.0
          %464 = vmatprep.subr.mxu0 0.0
          %465 = vmatpush1.msra.mxu0 0.0
          %466 = vmatprep.subr.mxu0 0.0
          %467 = vmatpush1.msra.mxu0 0.0
          %468 = vmatprep.subr.mxu0 0.0
          %469 = vmatpush1.msra.mxu0 0.0
          %470 = vmatprep.subr.mxu0 0.0
          %471 = vmatpush1.msra.mxu0 0.0
          %472 = vmatprep.subr.mxu0 0.0
          %473 = vmatpush1.msra.mxu0 0.0
          %474 = vmatprep.subr.mxu0 0.0
          %475 = vmatpush1.msra.mxu0 0.0
          %476 = vmatprep.subr.mxu0 0.0
          %477 = vmatpush1.msra.mxu0 0.0
          %478 = vmatprep.subr.mxu0 0.0
          %479 = vmatpush1.msra.mxu0 0.0
          %480 = vmatprep.subr.mxu0 0.0
          %481 = vmatpush1.msra.mxu0 0.0
          %482 = vmatprep.subr.mxu0 0.0
          %483 = vmatpush1.msra.mxu0 0.0
          %484 = vmatprep.subr.mxu0 0.0
          %485 = vmatpush1.msra.mxu0 0.0
          %486 = vmatprep.subr.mxu0 0.0
          %487 = vmatpush1.msra.mxu0 0.0
          %488 = vmatprep.mubr.f32.mxu0 0.0
          %489 = vmatmul.mubr.f32.gmra.mrb[0].mxu0 %v422
          %v490 = vpop.f32.mrb[0].mxu0
          %v491 = vadd.f32 0.0, %v490
          %v492 = vpop.f32.mrb[0].mxu0
          %493 = vdwg.mxu0
          %v495 = vsel %vm420, %v409, 0
          %497 = vmatprep.subr.mxu0 0.0
          %498 = vmatpush1.msra.mxu0 %v412
          %499 = vmatprep.subr.mxu0 0.0
          %500 = vmatpush1.msra.mxu0 %v413
          %501 = vmatprep.subr.mxu0 0.0
          %502 = vmatpush1.msra.mxu0 %v414
          %503 = vmatprep.subr.mxu0 0.0
          %504 = vmatpush1.msra.mxu0 %v415
          %505 = vmatprep.subr.mxu0 0.0
          %506 = vmatpush1.msra.mxu0 0.0
          %507 = vmatprep.subr.mxu0 0.0
          %508 = vmatpush1.msra.mxu0 0.0
          %509 = vmatprep.subr.mxu0 0.0
          %510 = vmatpush1.msra.mxu0 0.0
          %511 = vmatprep.subr.mxu0 0.0
          %512 = vmatpush1.msra.mxu0 0.0
          %513 = vmatprep.subr.mxu0 0.0
          %514 = vmatpush1.msra.mxu0 0.0
          %515 = vmatprep.subr.mxu0 0.0
          %516 = vmatpush1.msra.mxu0 0.0
          %517 = vmatprep.subr.mxu0 0.0
          %518 = vmatpush1.msra.mxu0 0.0
          %519 = vmatprep.subr.mxu0 0.0
          %520 = vmatpush1.msra.mxu0 0.0
          %521 = vmatprep.subr.mxu0 0.0
          %522 = vmatpush1.msra.mxu0 0.0
          %523 = vmatprep.subr.mxu0 0.0
          %524 = vmatpush1.msra.mxu0 0.0
          %525 = vmatprep.subr.mxu0 0.0
          %526 = vmatpush1.msra.mxu0 0.0
          %527 = vmatprep.subr.mxu0 0.0
          %528 = vmatpush1.msra.mxu0 0.0
          %529 = vmatprep.subr.mxu0 0.0
          %530 = vmatpush1.msra.mxu0 0.0
          %531 = vmatprep.subr.mxu0 0.0
          %532 = vmatpush1.msra.mxu0 0.0
          %533 = vmatprep.subr.mxu0 0.0
          %534 = vmatpush1.msra.mxu0 0.0
          %535 = vmatprep.subr.mxu0 0.0
          %536 = vmatpush1.msra.mxu0 0.0
          %537 = vmatprep.subr.mxu0 0.0
          %538 = vmatpush1.msra.mxu0 0.0
          %539 = vmatprep.subr.mxu0 0.0
          %540 = vmatpush1.msra.mxu0 0.0
          %541 = vmatprep.subr.mxu0 0.0
          %542 = vmatpush1.msra.mxu0 0.0
          %543 = vmatprep.subr.mxu0 0.0
          %544 = vmatpush1.msra.mxu0 0.0
          %545 = vmatprep.subr.mxu0 0.0
          %546 = vmatpush1.msra.mxu0 0.0
          %547 = vmatprep.subr.mxu0 0.0
          %548 = vmatpush1.msra.mxu0 0.0
          %549 = vmatprep.subr.mxu0 0.0
          %550 = vmatpush1.msra.mxu0 0.0
          %551 = vmatprep.subr.mxu0 0.0
          %552 = vmatpush1.msra.mxu0 0.0
          %553 = vmatprep.subr.mxu0 0.0
          %554 = vmatpush1.msra.mxu0 0.0
          %555 = vmatprep.subr.mxu0 0.0
          %556 = vmatpush1.msra.mxu0 0.0
          %557 = vmatprep.subr.mxu0 0.0
          %558 = vmatpush1.msra.mxu0 0.0
          %559 = vmatprep.subr.mxu0 0.0
          %560 = vmatpush1.msra.mxu0 0.0
          %561 = vmatprep.mubr.f32.mxu0 0.0
          %562 = vmatmul.mubr.f32.gmra.mrb[0].mxu0 %v495
          %v563 = vpop.f32.mrb[0].mxu0
          %v564 = vadd.f32 %v491, %v563
          %v565 = vpop.f32.mrb[0].mxu0
          %566 = vdwg.mxu0
          %v567 = vld [vmem:[%s8] sm:$0x1]
          %v569 = vlaneseq
          %v570 = vshrl.u32 %v569, 7
          %v571 = vsub.s32 0, %v570
          %v572 = vrot.slane %v567, %v571
          %v574 = vadd.f32 %v564, %v572
          %v575 = vxor.u32 %v574, 2147483648
          %v576 = vmul.f32 %v575, 1.442695
          %v577 = vpow.pop %v576
          %v578 = vadd.f32 %v577, 1.0
          %v579 = vrcp.pop %v578
          %v580 = vmul.f32 1.0, %v579
          %v581 = vtanh.pop %v574
          %583 = vrot.lane.b32.xlu0 %v411, 32
          %v584 = vpop.permute.xlu0 %583
          %v586 = vmul.f32 %v580, %v584
          %588 = vrot.lane.b32.xlu0 %v581, 64
          %v589 = vpop.permute.xlu0 %588
          %v591 = vmul.f32 %v580, %v589
          %593 = vrot.lane.b32.xlu0 %v591, 32
          %v594 = vpop.permute.xlu0 %593
          %v596 = vadd.f32 %v586, %v594
          %v597 = vtanh.pop %v596
          %599 = vrot.lane.b32.xlu0 %v597, 64
          %v600 = vpop.permute.xlu0 %599
          %v602 = vmul.f32 %v580, %v600
          %604 = vrot.lane.b32.xlu0 %v602, 32
          %v605 = vpop.permute.xlu0 %604
          %607 = vst.msk [vmem:[#allocation2] sm:$0xff] %vm420, %v605
          %609 = vrot.lane.b32.xlu0 %v596, 96
          %v610 = vpop.permute.xlu0 %609
          %612 = vst.msk [vmem:[#allocation3] sm:$0xff] %vm420, %v610
          %s613 = scalar_lea.vmem [#allocation2], 8
          %v614 = vld [vmem:[%s613] sm:$0xff]
          %s615 = scalar_lea.vmem [#allocation3], 8
          %v616 = vld [vmem:[%s615] sm:$0xff]
          %v617 = vld [vmem:[%s5] sm:$0xff]
          %v618 = vld [vmem:[%s5 + $0x8] sm:$0xff]
          %v619 = vld [vmem:[%s5 + $0x10] sm:$0xff]
          %v620 = vld [vmem:[%s5 + $0x18] sm:$0xff]
          %v621 = vld [vmem:[%s7] sm:$0xff]
          %v622 = vld [vmem:[%s7 + $0x8] sm:$0xff]
          %v623 = vld [vmem:[%s7 + $0x10] sm:$0xff]
          %v624 = vld [vmem:[%s7 + $0x18] sm:$0xff]
          %v626 = vsel %vm420, %v614, 0
          %628 = vmatprep.subr.mxu0 0.0
          %629 = vmatpush1.msra.mxu0 %v621
          %630 = vmatprep.subr.mxu0 0.0
          %631 = vmatpush1.msra.mxu0 %v622
          %632 = vmatprep.subr.mxu0 0.0
          %633 = vmatpush1.msra.mxu0 %v623
          %634 = vmatprep.subr.mxu0 0.0
          %635 = vmatpush1.msra.mxu0 %v624
          %636 = vmatprep.subr.mxu0 0.0
          %637 = vmatpush1.msra.mxu0 0.0
          %638 = vmatprep.subr.mxu0 0.0
          %639 = vmatpush1.msra.mxu0 0.0
          %640 = vmatprep.subr.mxu0 0.0
          %641 = vmatpush1.msra.mxu0 0.0
          %642 = vmatprep.subr.mxu0 0.0
          %643 = vmatpush1.msra.mxu0 0.0
          %644 = vmatprep.subr.mxu0 0.0
          %645 = vmatpush1.msra.mxu0 0.0
          %646 = vmatprep.subr.mxu0 0.0
          %647 = vmatpush1.msra.mxu0 0.0
          %648 = vmatprep.subr.mxu0 0.0
          %649 = vmatpush1.msra.mxu0 0.0
          %650 = vmatprep.subr.mxu0 0.0
          %651 = vmatpush1.msra.mxu0 0.0
          %652 = vmatprep.subr.mxu0 0.0
          %653 = vmatpush1.msra.mxu0 0.0
          %654 = vmatprep.subr.mxu0 0.0
          %655 = vmatpush1.msra.mxu0 0.0
          %656 = vmatprep.subr.mxu0 0.0
          %657 = vmatpush1.msra.mxu0 0.0
          %658 = vmatprep.subr.mxu0 0.0
          %659 = vmatpush1.msra.mxu0 0.0
          %660 = vmatprep.subr.mxu0 0.0
          %661 = vmatpush1.msra.mxu0 0.0
          %662 = vmatprep.subr.mxu0 0.0
          %663 = vmatpush1.msra.mxu0 0.0
          %664 = vmatprep.subr.mxu0 0.0
          %665 = vmatpush1.msra.mxu0 0.0
          %666 = vmatprep.subr.mxu0 0.0
          %667 = vmatpush1.msra.mxu0 0.0
          %668 = vmatprep.subr.mxu0 0.0
          %669 = vmatpush1.msra.mxu0 0.0
          %670 = vmatprep.subr.mxu0 0.0
          %671 = vmatpush1.msra.mxu0 0.0
          %672 = vmatprep.subr.mxu0 0.0
          %673 = vmatpush1.msra.mxu0 0.0
          %674 = vmatprep.subr.mxu0 0.0
          %675 = vmatpush1.msra.mxu0 0.0
          %676 = vmatprep.subr.mxu0 0.0
          %677 = vmatpush1.msra.mxu0 0.0
          %678 = vmatprep.subr.mxu0 0.0
          %679 = vmatpush1.msra.mxu0 0.0
          %680 = vmatprep.subr.mxu0 0.0
          %681 = vmatpush1.msra.mxu0 0.0
          %682 = vmatprep.subr.mxu0 0.0
          %683 = vmatpush1.msra.mxu0 0.0
          %684 = vmatprep.subr.mxu0 0.0
          %685 = vmatpush1.msra.mxu0 0.0
          %686 = vmatprep.subr.mxu0 0.0
          %687 = vmatpush1.msra.mxu0 0.0
          %688 = vmatprep.subr.mxu0 0.0
          %689 = vmatpush1.msra.mxu0 0.0
          %690 = vmatprep.subr.mxu0 0.0
          %691 = vmatpush1.msra.mxu0 0.0
          %692 = vmatprep.mubr.f32.mxu0 0.0
          %693 = vmatmul.mubr.f32.gmra.mrb[0].mxu0 %v626
          %v694 = vpop.f32.mrb[0].mxu0
          %v695 = vadd.f32 0.0, %v694
          %v696 = vpop.f32.mrb[0].mxu0
          %697 = vdwg.mxu0
          %v698 = vsel %vm420, %v605, 0
          %700 = vmatprep.subr.mxu0 0.0
          %701 = vmatpush1.msra.mxu0 %v617
          %702 = vmatprep.subr.mxu0 0.0
          %703 = vmatpush1.msra.mxu0 %v618
          %704 = vmatprep.subr.mxu0 0.0
          %705 = vmatpush1.msra.mxu0 %v619
          %706 = vmatprep.subr.mxu0 0.0
          %707 = vmatpush1.msra.mxu0 %v620
          %708 = vmatprep.subr.mxu0 0.0
          %709 = vmatpush1.msra.mxu0 0.0
          %710 = vmatprep.subr.mxu0 0.0
          %711 = vmatpush1.msra.mxu0 0.0
          %712 = vmatprep.subr.mxu0 0.0
          %713 = vmatpush1.msra.mxu0 0.0
          %714 = vmatprep.subr.mxu0 0.0
          %715 = vmatpush1.msra.mxu0 0.0
          %716 = vmatprep.subr.mxu0 0.0
          %717 = vmatpush1.msra.mxu0 0.0
          %718 = vmatprep.subr.mxu0 0.0
          %719 = vmatpush1.msra.mxu0 0.0
          %720 = vmatprep.subr.mxu0 0.0
          %721 = vmatpush1.msra.mxu0 0.0
          %722 = vmatprep.subr.mxu0 0.0
          %723 = vmatpush1.msra.mxu0 0.0
          %724 = vmatprep.subr.mxu0 0.0
          %725 = vmatpush1.msra.mxu0 0.0
          %726 = vmatprep.subr.mxu0 0.0
          %727 = vmatpush1.msra.mxu0 0.0
          %728 = vmatprep.subr.mxu0 0.0
          %729 = vmatpush1.msra.mxu0 0.0
          %730 = vmatprep.subr.mxu0 0.0
          %731 = vmatpush1.msra.mxu0 0.0
          %732 = vmatprep.subr.mxu0 0.0
          %733 = vmatpush1.msra.mxu0 0.0
          %734 = vmatprep.subr.mxu0 0.0
          %735 = vmatpush1.msra.mxu0 0.0
          %736 = vmatprep.subr.mxu0 0.0
          %737 = vmatpush1.msra.mxu0 0.0
          %738 = vmatprep.subr.mxu0 0.0
          %739 = vmatpush1.msra.mxu0 0.0
          %740 = vmatprep.subr.mxu0 0.0
          %741 = vmatpush1.msra.mxu0 0.0
          %742 = vmatprep.subr.mxu0 0.0
          %743 = vmatpush1.msra.mxu0 0.0
          %744 = vmatprep.subr.mxu0 0.0
          %745 = vmatpush1.msra.mxu0 0.0
          %746 = vmatprep.subr.mxu0 0.0
          %747 = vmatpush1.msra.mxu0 0.0
          %748 = vmatprep.subr.mxu0 0.0
          %749 = vmatpush1.msra.mxu0 0.0
          %750 = vmatprep.subr.mxu0 0.0
          %751 = vmatpush1.msra.mxu0 0.0
          %752 = vmatprep.subr.mxu0 0.0
          %753 = vmatpush1.msra.mxu0 0.0
          %754 = vmatprep.subr.mxu0 0.0
          %755 = vmatpush1.msra.mxu0 0.0
          %756 = vmatprep.subr.mxu0 0.0
          %757 = vmatpush1.msra.mxu0 0.0
          %758 = vmatprep.subr.mxu0 0.0
          %759 = vmatpush1.msra.mxu0 0.0
          %760 = vmatprep.subr.mxu0 0.0
          %761 = vmatpush1.msra.mxu0 0.0
          %762 = vmatprep.subr.mxu0 0.0
          %763 = vmatpush1.msra.mxu0 0.0
          %764 = vmatprep.mubr.f32.mxu0 0.0
          %765 = vmatmul.mubr.f32.gmra.mrb[0].mxu0 %v698
          %v766 = vpop.f32.mrb[0].mxu0
          %v767 = vadd.f32 %v695, %v766
          %v768 = vpop.f32.mrb[0].mxu0
          %769 = vdwg.mxu0
          %v770 = vld [vmem:[%s9] sm:$0x1]
          %v772 = vlaneseq
          %v773 = vshrl.u32 %v772, 7
          %v774 = vsub.s32 0, %v773
          %v775 = vrot.slane %v770, %v774
          %v777 = vadd.f32 %v767, %v775
          %v778 = vxor.u32 %v777, 2147483648
          %v779 = vmul.f32 %v778, 1.442695
          %v780 = vpow.pop %v779
          %v781 = vadd.f32 %v780, 1.0
          %v782 = vrcp.pop %v781
          %v783 = vmul.f32 1.0, %v782
          %v784 = vtanh.pop %v777
          %786 = vrot.lane.b32.xlu0 %v616, 32
          %v787 = vpop.permute.xlu0 %786
          %v789 = vmul.f32 %v783, %v787
          %791 = vrot.lane.b32.xlu0 %v784, 64
          %v792 = vpop.permute.xlu0 %791
          %v794 = vmul.f32 %v783, %v792
          %796 = vrot.lane.b32.xlu0 %v794, 32
          %v797 = vpop.permute.xlu0 %796
          %v799 = vadd.f32 %v789, %v797
          %v800 = vtanh.pop %v799
          %802 = vrot.lane.b32.xlu0 %v800, 64
          %v803 = vpop.permute.xlu0 %802
          %v805 = vmul.f32 %v783, %v803
          %807 = vrot.lane.b32.xlu0 %v805, 32
          %v808 = vpop.permute.xlu0 %807
          %810 = vst.msk [vmem:[%s613] sm:$0xff] %vm420, %v808
          %812 = vrot.lane.b32.xlu0 %v799, 96
          %v813 = vpop.permute.xlu0 %812
          %815 = vst.msk [vmem:[%s615] sm:$0xff] %vm420, %v813
          %v816 = vld [vmem:[%s10] sm:$0xff]
          %v817 = vld [vmem:[%s10 + $0x8] sm:$0xff]
          %v818 = vld [vmem:[%s10 + $0x10] sm:$0xff]
          %v819 = vld [vmem:[%s10 + $0x18] sm:$0xff]
          %v820 = vld [vmem:[%s11] sm:$0x1]
          %v822 = vlaneseq
          %v823 = vshrl.u32 %v822, 7
          %v824 = vsub.s32 0, %v823
          %v825 = vrot.slane %v820, %v824
          %v827 = vsel %vm420, %v808, 0
          %829 = vmatprep.subr.mxu0 0.0
          %830 = vmatpush1.msra.mxu0 %v816
          %831 = vmatprep.subr.mxu0 0.0
          %832 = vmatpush1.msra.mxu0 %v817
          %833 = vmatprep.subr.mxu0 0.0
          %834 = vmatpush1.msra.mxu0 %v818
          %835 = vmatprep.subr.mxu0 0.0
          %836 = vmatpush1.msra.mxu0 %v819
          %837 = vmatprep.subr.mxu0 0.0
          %838 = vmatpush1.msra.mxu0 0.0
          %839 = vmatprep.subr.mxu0 0.0
          %840 = vmatpush1.msra.mxu0 0.0
          %841 = vmatprep.subr.mxu0 0.0
          %842 = vmatpush1.msra.mxu0 0.0
          %843 = vmatprep.subr.mxu0 0.0
          %844 = vmatpush1.msra.mxu0 0.0
          %845 = vmatprep.subr.mxu0 0.0
          %846 = vmatpush1.msra.mxu0 0.0
          %847 = vmatprep.subr.mxu0 0.0
          %848 = vmatpush1.msra.mxu0 0.0
          %849 = vmatprep.subr.mxu0 0.0
          %850 = vmatpush1.msra.mxu0 0.0
          %851 = vmatprep.subr.mxu0 0.0
          %852 = vmatpush1.msra.mxu0 0.0
          %853 = vmatprep.subr.mxu0 0.0
          %854 = vmatpush1.msra.mxu0 0.0
          %855 = vmatprep.subr.mxu0 0.0
          %856 = vmatpush1.msra.mxu0 0.0
          %857 = vmatprep.subr.mxu0 0.0
          %858 = vmatpush1.msra.mxu0 0.0
          %859 = vmatprep.subr.mxu0 0.0
          %860 = vmatpush1.msra.mxu0 0.0
          %861 = vmatprep.subr.mxu0 0.0
          %862 = vmatpush1.msra.mxu0 0.0
          %863 = vmatprep.subr.mxu0 0.0
          %864 = vmatpush1.msra.mxu0 0.0
          %865 = vmatprep.subr.mxu0 0.0
          %866 = vmatpush1.msra.mxu0 0.0
          %867 = vmatprep.subr.mxu0 0.0
          %868 = vmatpush1.msra.mxu0 0.0
          %869 = vmatprep.subr.mxu0 0.0
          %870 = vmatpush1.msra.mxu0 0.0
          %871 = vmatprep.subr.mxu0 0.0
          %872 = vmatpush1.msra.mxu0 0.0
          %873 = vmatprep.subr.mxu0 0.0
          %874 = vmatpush1.msra.mxu0 0.0
          %875 = vmatprep.subr.mxu0 0.0
          %876 = vmatpush1.msra.mxu0 0.0
          %877 = vmatprep.subr.mxu0 0.0
          %878 = vmatpush1.msra.mxu0 0.0
          %879 = vmatprep.subr.mxu0 0.0
          %880 = vmatpush1.msra.mxu0 0.0
          %881 = vmatprep.subr.mxu0 0.0
          %882 = vmatpush1.msra.mxu0 0.0
          %883 = vmatprep.subr.mxu0 0.0
          %884 = vmatpush1.msra.mxu0 0.0
          %885 = vmatprep.subr.mxu0 0.0
          %886 = vmatpush1.msra.mxu0 0.0
          %887 = vmatprep.subr.mxu0 0.0
          %888 = vmatpush1.msra.mxu0 0.0
          %889 = vmatprep.subr.mxu0 0.0
          %890 = vmatpush1.msra.mxu0 0.0
          %891 = vmatprep.subr.mxu0 0.0
          %892 = vmatpush1.msra.mxu0 0.0
          %893 = vmatprep.mubr.f32.mxu0 0.0
          %894 = vmatmul.mubr.f32.gmra.mrb[0].mxu0 %v827
          %v895 = vpop.f32.mrb[0].mxu0
          %v896 = vadd.f32 %v825, %v895
          %v897 = vpop.f32.mrb[0].mxu0
          %898 = vdwg.mxu0
          %899 = vst.msk [vmem:[%s384] sm:$0xff] %vm420, %v896
          %v900 = vlaneseq
          %v901 = vand.u32 %v900, 127
          %v902 = vcvt.s32.f32 %v901
          %v903 = vsel %vm420, %v896, -inf
          %904 = vmax.xlane.f32.xlu0 %v903
          %v905 = vpop.xlane.xlu0 %904
          %vm906 = vcmp.eq.f32.partialorder %v896, %v905
          %v907 = vsel %vm906, %v902, 32.0
          %v908 = vsel %vm420, %v907, inf
          %909 = vmin.xlane.f32.xlu0 %v908
          %v910 = vpop.xlane.xlu0 %909
          %vm911 = vcmp.eq.f32.partialorder %v902, %v910
          %v912 = vsel %vm911, 1, 0
          %v913 = vcvt.s32.f32 %v912
          %s914 = sld [smem:[#allocation6 + %s32]]
          %p915 = scmp.eq.s32.totalorder %s914, 1
          %s916 = scalar_select %p915, 1, 0
          %s917 = scvt.s32.f32 %s916
          %v918 = vld [vmem:[%s388] sm:$0xff]
          %v919 = vstv %s917
          %v920 = vmul.f32 %v919, %v918
          %s921 = ssub.f32 1.0, %s917
          %v922 = vstv %s921
          %v923 = vmul.f32 %v922, %v913
          %v924 = vadd.f32 %v920, %v923
          %925 = vst.msk [vmem:[#allocation4] sm:$0xff] %vm420, %v924
        $region72: #{seq2seq_forward.3} parent=63 // pred_fallthru
          _
        %s926 = sand.u32 %s276, 1
        %s927 = scalar_lea.sflag [#allocation8], %s926
        %s928 = sand.u32 %s276, 1
        %s929 = smul.addr %s928, 8
        %s930 = scalar_lea.vmem [#allocation7], %s929
        // Predicated region
        $region73: #{seq2seq_forward.3} parent=63 // pred_check
          %p931 = pneg %p286
        $region74: #{seq2seq_forward.3} parent=63 // pred_check_branch
          %933 = sbr.rel (%p931) target = $region76
        $region75: #{seq2seq_forward.3} parent=63 // pred_region
          %s935 = ssub.s32 128, 128
          %936 = vsyncadd %s927, %s935
          %s937 = smul.addr %s32, 128
          %s938 = scalar_lea.hbm %s12, %s937
          %s940 = sshll.u32 %s930, 4
          %s941 = int_to_ptr.vmem [resolvable:$true] %s940
          %943 = dma.vmem_to_hbm [thread:$0]  %s941, 128, %s938, %s927
        $region76: #{seq2seq_forward.3} parent=63 // pred_fallthru
          _
      $region64: #{seq2seq_forward.3} parent=5 // pred_fallthru
        _
      %p944 = scmp.le.s32.totalorder 2, %s27
      // Predicated region
      $region77: #{seq2seq_forward.3} parent=5 // pred_check
        %p945 = pneg %p944
      $region78: #{seq2seq_forward.3} parent=5 // pred_check_branch
        %947 = sbr.rel (%p945) target = $region80
      $region79: #{seq2seq_forward.3} parent=5 // pred_region
        %s948 = ssub.s32 %s27, 2
        // Predicated region
        $region81: #{seq2seq_forward.3} parent=79 // pred_check
          %p949 = pneg %p292
        $region82: #{seq2seq_forward.3} parent=79 // pred_check_branch
          %951 = sbr.rel (%p949) target = $region84
        $region83: #{seq2seq_forward.3} parent=79 // pred_region
          %s952 = sand.u32 %s277, 1
          %s953 = scalar_lea.sflag [#allocation8], %s952
          %s954 = sand.u32 %s277, 1
          %s955 = smul.addr %s954, 8
          %s956 = scalar_lea.vmem [#allocation7], %s955
          %957 = dma.done %s953, 128
        $region84: #{seq2seq_forward.3} parent=79 // pred_fallthru
          _
      $region80: #{seq2seq_forward.3} parent=5 // pred_fallthru
        _
    $region6: #{seq2seq_forward.3} parent=1 // loop_footer
      %s31 = sadd.s32 1, %s27
    $region7: #{seq2seq_forward.3} parent=1 // loop_footer_branch
      %26 = sbr.rel target = $region3
    $region8: #{seq2seq_forward.3} parent=1 // loop_exit
      _
    %958 = vsyncpa [#allocation8], 1
    %s959 = scalar_lea.sflag [#allocation8], 1
    %960 = vsyncpa %s959, 1

</llo_original>
